<compile_context>
chip_gen: v5e
topology: v5e:2x2
jax: 0.10.0
libtpu: 0.0.40
codegen_flags: <defaults>
</compile_context>

<pallas_src>
import functools

import jax
import jax.numpy as jnp
from jax.experimental import pallas as pl
from jax.experimental.pallas import tpu as pltpu


def highway_kernel(x_ref, w_ref, b_ref, o_ref, *, block_n, compute_dtype, feat_axis):
    """Computes one (block_b, block_n) output tile of the highway layer.

    x_ref : (block_b, D)         f32            -- full feature rows (matmul K)
    w_ref : (D, 2*block_n)       compute_dtype  -- fused [Wn_tile | Wg_tile]
    b_ref : (1, 2*block_n)       f32            -- fused [bn_tile | bg_tile]
    o_ref : (block_b, block_n)
    """
    x = x_ref[...]                              # f32 rows (also the residual source)
    x_mm = x.astype(compute_dtype)              # bf16 MXU operand when requested
    # One fused MXU matmul for both the normal and the gate projections.
    z = jnp.dot(x_mm, w_ref[...], preferred_element_type=jnp.float32) + b_ref[...]
    h = jnp.maximum(z[:, :block_n], 0.0)        # relu(x @ Wn + bn)
    g = jax.nn.sigmoid(z[:, block_n:])          # sigmoid(x @ Wg + bg)
    if feat_axis is None:
        xr = x                                  # block_n == D: residual is the whole tile
    else:
        j = pl.program_id(feat_axis)
        start = pl.multiple_of(j * block_n, 128)
        xr = x_ref[:, pl.ds(start, block_n)]    # residual slice of this N tile
    # h*g + (1-g)*x  ==  g*(h - x) + x   (one fewer VPU mul, same numerics)
    o_ref[...] = (g * (h - xr) + xr).astype(o_ref.dtype)


def _fuse_params(wn, bn, wg, bg, block_n):
    """Interleave Wn/Wg (and bn/bg) per N tile so a single (D, 2*block_n)
    weight block carries both the normal and gate columns for that tile."""
    D = wn.shape[0]
    nt = D // block_n
    w = jnp.stack(
        [wn.reshape(D, nt, block_n), wg.reshape(D, nt, block_n)], axis=2
    ).reshape(D, 2 * D)
    b = jnp.stack(
        [bn.reshape(1, nt, block_n), bg.reshape(1, nt, block_n)], axis=2
    ).reshape(1, 2 * D)
    return w, b


def _round_up(v, m):
    return ((v + m - 1) // m) * m


def _vmem_budget_bytes():
    """Generation-aware VMEM budget: ~75% of physical, capped at 96 MiB."""
    phys = 64 * 1024 * 1024  # conservative fallback: v7x physical VMEM per TC
    try:
        info = pltpu.get_tpu_info()
        phys = int(getattr(info, "vmem_capacity_bytes", phys) or phys)
    except Exception:
        pass
    return min((phys * 3) // 4, 96 * 1024 * 1024)


def _footprint(bb, D, bn, w_itemsize):
    """Approximate double-buffered VMEM footprint of the pipelined operands."""
    return (2 * bb * D * 4                 # x tile (f32)
            + 2 * D * 2 * bn * w_itemsize  # fused weight tile
            + 2 * 2 * bn * 4               # fused bias tile
            + 2 * bb * bn * 4)             # output tile


def _pick_block_n(D, bb, w_itemsize, budget):
    if D % 128 != 0:
        return D  # BlockSpec requires full-dim blocks when not lane-aligned
    candidates = sorted((n for n in range(128, D + 1, 128) if D % n == 0),
                        reverse=True)
    for n in candidates:
        if _footprint(bb, D, n, w_itemsize) <= budget:
            return n
    return 128


@functools.partial(jax.jit, static_argnames=("block_b", "block_n", "compute_dtype"))
def highway_forward(x, wn, bn, wg, bg, *, block_b=256, block_n=None,
                    compute_dtype=jnp.float32):
    B, D = x.shape
    w_itemsize = jnp.dtype(compute_dtype).itemsize
    budget = _vmem_budget_bytes()

    # --- batch tile: big (fills MXU M dim), clamped to the 8-rounded batch ---
    bb = min(block_b, _round_up(B, 8))
    bb = max(8, (bb // 8) * 8)

    # --- feature tile: prefer weight residency (block_n = D) when it fits ---
    if block_n is None:
        block_n = _pick_block_n(D, bb, w_itemsize, budget)
    assert D % block_n == 0, "block_n must divide the feature dim"
    assert block_n == D or block_n % 128 == 0, "block_n must be lane aligned"
    weight_resident = (block_n == D)

    # Fuse [Wn | Wg] / [bn | bg] (interleaved per N tile) into one matmul operand.
    w_fused, b_fused = _fuse_params(wn, bn, wg, bg, block_n)
    if compute_dtype != jnp.float32:
        # bf16 weights: halves weight HBM traffic and VMEM footprint (v6e/v7x).
        w_fused = w_fused.astype(compute_dtype)

    kernel = functools.partial(
        highway_kernel, block_n=block_n, compute_dtype=compute_dtype,
        feat_axis=None if weight_resident else 0)

    if weight_resident:
        # 1-D batch grid; the fused weight block index never changes -> DMA'd once.
        grid = (pl.cdiv(B, bb),)
        in_specs = [
            pl.BlockSpec((bb, D), lambda i: (i, 0)),           # x (full K, residual)
            pl.BlockSpec((D, 2 * D), lambda i: (0, 0)),        # fused W (resident)
            pl.BlockSpec((1, 2 * D), lambda i: (0, 0)),        # fused bias (resident)
        ]
        out_specs = pl.BlockSpec((bb, D), lambda i: (i, 0))
        dim_sem = ("parallel",)
    else:
        # Feature axis outer, batch axis inner: the weight tile is the revisited
        # (DMA-skipped) operand; x is the re-fetched one (cheaper for large B).
        grid = (D // block_n, pl.cdiv(B, bb))
        in_specs = [
            pl.BlockSpec((bb, D), lambda j, i: (i, 0)),            # x (full K)
            pl.BlockSpec((D, 2 * block_n), lambda j, i: (0, j)),   # fused W tile
            pl.BlockSpec((1, 2 * block_n), lambda j, i: (0, j)),   # fused bias tile
        ]
        out_specs = pl.BlockSpec((bb, block_n), lambda j, i: (i, j))
        dim_sem = ("parallel", "parallel")

    reread = 1 if weight_resident else (D // block_n)
    cost = pl.CostEstimate(
        flops=4 * B * D * D,                       # two DxD matmuls
        transcendentals=B * D,                     # sigmoid
        bytes_accessed=(reread * B * D * 4         # x reads
                        + B * D * 4                # output writes
                        + 2 * D * D * w_itemsize   # fused weights (read once)
                        + 2 * D * 4),              # fused biases
    )

    return pl.pallas_call(
        kernel,
        out_shape=jax.ShapeDtypeStruct((B, D), x.dtype),
        grid_spec=pltpu.PrefetchScalarGridSpec(
            num_scalar_prefetch=0,
            grid=grid,
            in_specs=in_specs,
            out_specs=out_specs,
        ),
        compiler_params=pltpu.CompilerParams(
            dimension_semantics=dim_sem,
            vmem_limit_bytes=int(budget),
        ),
        cost_estimate=cost,
    )(x, w_fused, b_fused)


def init_highway_params(key, input_size, gate_bias=-2.0, dtype=jnp.float32):
    """Deterministic init mirroring nn.Linear default (uniform +-1/sqrt(D)),
    with the gate bias set to the constant gate_bias, as in the module."""
    k1, k2, k3 = jax.random.split(key, 3)
    bound = float(1.0 / (input_size ** 0.5))
    # Stored pre-transposed: y = x @ W  (== x @ W_pt^T with W_pt = W.T)
    wn = jax.random.uniform(k1, (input_size, input_size), dtype, -bound, bound)
    bn = jax.random.uniform(k2, (1, input_size), dtype, -bound, bound)
    wg = jax.random.uniform(k3, (input_size, input_size), dtype, -bound, bound)
    bg = jnp.full((1, input_size), gate_bias, dtype=dtype)
    return wn, bn, wg, bg


def highway_reference(x, wn, bn, wg, bg):
    h = jax.nn.relu(x @ wn + bn)
    g = jax.nn.sigmoid(x @ wg + bg)
    return h * g + (1.0 - g) * x


if __name__ == "__main__":
    key = jax.random.PRNGKey(0)
    kx, kp = jax.random.split(key)

    # Small, TPU-friendly shapes: ragged batch (exercises boundary-block
    # masking, no jnp.pad) and two 128-wide feature tiles.
    B, D = 200, 256
    x = jax.random.normal(kx, (B, D), dtype=jnp.float32)
    wn, bn, wg, bg = init_highway_params(kp, D, gate_bias=-2.0)
    y_ref = highway_reference(x, wn, bn, wg, bg)

    # 1) Default config: weight-resident (block_n = D), single x stream, f32 MXU.
    y = jax.block_until_ready(highway_forward(x, wn, bn, wg, bg))
    assert y.shape == (B, D)
    assert jnp.allclose(y, y_ref, atol=1e-3, rtol=1e-3), "f32 mismatch vs reference"

    # 2) Feature-tiled path (batch innermost, weight tile revisited) with a
    #    partial boundary batch block (200 = 128 + 72) — no pad round-trip.
    y_t = jax.block_until_ready(
        highway_forward(x, wn, bn, wg, bg, block_b=128, block_n=128))
    assert jnp.allclose(y_t, y_ref, atol=1e-3, rtol=1e-3), "tiled-path mismatch"

    # 3) bf16 MXU fast path (v6e/v7x); accumulation + elementwise stay f32.
    y_bf = jax.block_until_ready(
        highway_forward(x, wn, bn, wg, bg, compute_dtype=jnp.bfloat16))
    assert jnp.allclose(y_bf, y_ref, atol=5e-2, rtol=5e-2), "bf16 mismatch vs reference"

    print("KERNEL_OK")
</pallas_src>

<mosaic_0001>
module attributes {stable_mosaic.version = 11 : i64} {
  func.func @highway_kernel(%arg0: i32, %arg1: memref<200x256xf32, #tpu.memory_space<vmem>>, %arg2: memref<256x512xf32, #tpu.memory_space<vmem>>, %arg3: memref<1x512xf32, #tpu.memory_space<vmem>>, %arg4: memref<200x256xf32, #tpu.memory_space<vmem>>) attributes {dimension_semantics = [#tpu.dimension_semantics<parallel>], iteration_bounds = array<i64: 1>, scalar_prefetch = 0 : i64, scratch_operands = 0 : i64, tpu.core_type = #tpu.core_type<tc>, window_params = [{transform_indices = @transform_0, window_bounds = array<i64: 200, 256>}, {pipeline_mode = #tpu.pipeline_mode<synchronous>, transform_indices = @transform_1, window_bounds = array<i64: 256, 512>}, {pipeline_mode = #tpu.pipeline_mode<synchronous>, transform_indices = @transform_2, window_bounds = array<i64: 1, 512>}, {transform_indices = @transform_3, window_bounds = array<i64: 200, 256>}]} {
    %c0 = arith.constant 0 : index
    %c0_0 = arith.constant 0 : index
    %0 = vector.load %arg1[%c0, %c0_0] : memref<200x256xf32, #tpu.memory_space<vmem>>, vector<200x256xf32>
    %c0_1 = arith.constant 0 : index
    %c0_2 = arith.constant 0 : index
    %1 = vector.load %arg2[%c0_1, %c0_2] : memref<256x512xf32, #tpu.memory_space<vmem>>, vector<256x512xf32>
    %cst = arith.constant dense<0.000000e+00> : vector<200x512xf32>
    %2 = tpu.matmul %0, %1, %cst {dimension_numbers = #tpu.dot_dimension_numbers<[1], [0], [0], [1], [0, 0, 1, 1], [], []>} : vector<200x256xf32>, vector<256x512xf32>, vector<200x512xf32> -> vector<200x512xf32>
    %c0_3 = arith.constant 0 : index
    %c0_4 = arith.constant 0 : index
    %3 = vector.load %arg3[%c0_3, %c0_4] : memref<1x512xf32, #tpu.memory_space<vmem>>, vector<1x512xf32>
    %4 = vector.broadcast %3 : vector<1x512xf32> to vector<200x512xf32>
    %5 = arith.addf %2, %4 : vector<200x512xf32>
    %6 = vector.extract_strided_slice %5 {offsets = [0, 0], sizes = [200, 256], strides = [1, 1]} : vector<200x512xf32> to vector<200x256xf32>
    %cst_5 = arith.constant 0.000000e+00 : f32
    %7 = vector.broadcast %cst_5 : f32 to vector<200x256xf32>
    %8 = arith.maximumf %6, %7 : vector<200x256xf32>
    %9 = vector.extract_strided_slice %5 {offsets = [0, 256], sizes = [200, 256], strides = [1, 1]} : vector<200x512xf32> to vector<200x256xf32>
    %10 = arith.negf %9 : vector<200x256xf32>
    %11 = math.exp %10 : vector<200x256xf32>
    %cst_6 = arith.constant 1.000000e+00 : f32
    %12 = vector.broadcast %cst_6 : f32 to vector<200x256xf32>
    %13 = arith.addf %12, %11 : vector<200x256xf32>
    %14 = arith.divf %12, %13 : vector<200x256xf32>
    %15 = arith.subf %8, %0 : vector<200x256xf32>
    %16 = arith.mulf %14, %15 : vector<200x256xf32>
    %17 = arith.addf %16, %0 : vector<200x256xf32>
    %c0_7 = arith.constant 0 : index
    %c0_8 = arith.constant 0 : index
    %18 = vector.load %arg4[%c0_7, %c0_8] : memref<200x256xf32, #tpu.memory_space<vmem>>, vector<200x256xf32>
    tpu.vector_store %arg4[%c0_7, %c0_8], %17 {strides = array<i32>} : memref<200x256xf32, #tpu.memory_space<vmem>>, vector<200x256xf32>,
    return
  }
  func.func @transform_0(%arg0: i32) -> (i32, i32) {
    %c0_i32 = arith.constant 0 : i32
    %c0_i32_0 = arith.constant 0 : i32
    return %arg0, %c0_i32 : i32, i32
  }
  func.func @transform_1(%arg0: i32) -> (i32, i32) {
    %c0_i32 = arith.constant 0 : i32
    %c0_i32_0 = arith.constant 0 : i32
    %c0_i32_1 = arith.constant 0 : i32
    return %c0_i32, %c0_i32_0 : i32, i32
  }
  func.func @transform_2(%arg0: i32) -> (i32, i32) {
    %c0_i32 = arith.constant 0 : i32
    %c0_i32_0 = arith.constant 0 : i32
    %c0_i32_1 = arith.constant 0 : i32
    return %c0_i32, %c0_i32_0 : i32, i32
  }
  func.func @transform_3(%arg0: i32) -> (i32, i32) {
    %c0_i32 = arith.constant 0 : i32
    %c0_i32_0 = arith.constant 0 : i32
    return %arg0, %c0_i32 : i32, i32
  }
}

</mosaic_0001>

<llo_original>
// kernel: highway_forward.1
$region0: #{highway_forward.1}
  #allocation0 [shape = 'u32[]', space=smem, size = 0x4, offset = 0x4, fixed_abs, tag = 'smem constant byte address 0x4 - core index']
  #allocation1 [shape = 'u32[72,128]{1,0:T(1,128)}', space=vmem, size = 0x9000, scoped, tag = 'internal scratch']
  %s0 = inlined_call_operand.vmem [shape: f32[200,256], index: 0, kind: input, shape index: {}]
  %s1 = inlined_call_operand.vmem [shape: f32[256,512], index: 1, kind: input, shape index: {}]
  %s2 = inlined_call_operand.vmem [shape: f32[1,512], index: 2, kind: input, shape index: {}]
  %s3 = inlined_call_operand.hbm [shape: f32[200,256], index: 3, kind: output, shape index: {}]
  %s4 = sld [smem:[#allocation0]]
  $region22: #{highway_forward.1} parent=0
    _
  %s6 = ssub.s32 1, %s4
  %s7 = scalar_select 0, %s6, %s4
  $region1: #{highway_forward.1} parent=0
    #allocation2 [shape = 'u8[204800]{0}', space=vmem, size = 0x32000, scoped, tag = 'output window, operand 0, single buffered']
    #allocation3 [shape = 's32[1]{0}', space=sflag, size = 0x4, scoped, tag = 'scoped memory for highway_forward.1']
    %8 = vsyncpa [#allocation3], 0
    // Predicated region
    $region2: #{highway_forward.1} parent=1 // pred_check
      _
    $region3: #{highway_forward.1} parent=1 // pred_check_branch
      %10 = sbr.rel (0) target = $region5
    $region4: #{highway_forward.1} parent=1 // pred_region
      _
    $region5: #{highway_forward.1} parent=1 // pred_fallthru
      _
    // Predicated region
    $region6: #{highway_forward.1} parent=1 // pred_check
      _
    $region7: #{highway_forward.1} parent=1 // pred_check_branch
      %12 = sbr.rel (0) target = $region9
    $region8: #{highway_forward.1} parent=1 // pred_region
      _
    $region9: #{highway_forward.1} parent=1 // pred_fallthru
      _
    // Predicated region
    $region10: #{highway_forward.1} parent=1 // pred_check
      _
    $region11: #{highway_forward.1} parent=1 // pred_check_branch
      %14 = sbr.rel (0) target = $region13
    $region12: #{highway_forward.1} parent=1 // pred_region
      _
    $region13: #{highway_forward.1} parent=1 // pred_fallthru
      _
    %v15 = vld [vmem:[%s0] sm:$0xff]
    %v16 = vld [vmem:[%s0 + $0x8] sm:$0xff]
    %v17 = vld [vmem:[%s0 + $0x10] sm:$0xff]
    %v18 = vld [vmem:[%s0 + $0x18] sm:$0xff]
    %v19 = vld [vmem:[%s0 + $0x20] sm:$0xff]
    %v20 = vld [vmem:[%s0 + $0x28] sm:$0xff]
    %v21 = vld [vmem:[%s0 + $0x30] sm:$0xff]
    %v22 = vld [vmem:[%s0 + $0x38] sm:$0xff]
    %v23 = vld [vmem:[%s0 + $0x40] sm:$0xff]
    %v24 = vld [vmem:[%s0 + $0x48] sm:$0xff]
    %v25 = vld [vmem:[%s0 + $0x50] sm:$0xff]
    %v26 = vld [vmem:[%s0 + $0x58] sm:$0xff]
    %v27 = vld [vmem:[%s0 + $0x60] sm:$0xff]
    %v28 = vld [vmem:[%s0 + $0x68] sm:$0xff]
    %v29 = vld [vmem:[%s0 + $0x70] sm:$0xff]
    %v30 = vld [vmem:[%s0 + $0x78] sm:$0xff]
    %v31 = vld [vmem:[%s0 + $0x80] sm:$0xff]
    %v32 = vld [vmem:[%s0 + $0x88] sm:$0xff]
    %v33 = vld [vmem:[%s0 + $0x90] sm:$0xff]
    %v34 = vld [vmem:[%s0 + $0x98] sm:$0xff]
    %v35 = vld [vmem:[%s0 + $0xa0] sm:$0xff]
    %v36 = vld [vmem:[%s0 + $0xa8] sm:$0xff]
    %v37 = vld [vmem:[%s0 + $0xb0] sm:$0xff]
    %v38 = vld [vmem:[%s0 + $0xb8] sm:$0xff]
    %v39 = vld [vmem:[%s0 + $0xc0] sm:$0xff]
    %v40 = vld [vmem:[%s0 + $0xc8] sm:$0xff]
    %v41 = vld [vmem:[%s0 + $0xd0] sm:$0xff]
    %v42 = vld [vmem:[%s0 + $0xd8] sm:$0xff]
    %v43 = vld [vmem:[%s0 + $0xe0] sm:$0xff]
    %v44 = vld [vmem:[%s0 + $0xe8] sm:$0xff]
    %v45 = vld [vmem:[%s0 + $0xf0] sm:$0xff]
    %v46 = vld [vmem:[%s0 + $0xf8] sm:$0xff]
    %v47 = vld [vmem:[%s0 + $0x100] sm:$0xff]
    %v48 = vld [vmem:[%s0 + $0x108] sm:$0xff]
    %v49 = vld [vmem:[%s0 + $0x110] sm:$0xff]
    %v50 = vld [vmem:[%s0 + $0x118] sm:$0xff]
    %v51 = vld [vmem:[%s0 + $0x120] sm:$0xff]
    %v52 = vld [vmem:[%s0 + $0x128] sm:$0xff]
    %v53 = vld [vmem:[%s0 + $0x130] sm:$0xff]
    %v54 = vld [vmem:[%s0 + $0x138] sm:$0xff]
    %v55 = vld [vmem:[%s0 + $0x140] sm:$0xff]
    %v56 = vld [vmem:[%s0 + $0x148] sm:$0xff]
    %v57 = vld [vmem:[%s0 + $0x150] sm:$0xff]
    %v58 = vld [vmem:[%s0 + $0x158] sm:$0xff]
    %v59 = vld [vmem:[%s0 + $0x160] sm:$0xff]
    %v60 = vld [vmem:[%s0 + $0x168] sm:$0xff]
    %v61 = vld [vmem:[%s0 + $0x170] sm:$0xff]
    %v62 = vld [vmem:[%s0 + $0x178] sm:$0xff]
    %v63 = vld [vmem:[%s0 + $0x180] sm:$0xff]
    %v64 = vld [vmem:[%s0 + $0x188] sm:$0xff]
    %v65 = vld [vmem:[%s1] sm:$0xff]
    %v66 = vld [vmem:[%s1 + $0x8] sm:$0xff]
    %v67 = vld [vmem:[%s1 + $0x10] sm:$0xff]
    %v68 = vld [vmem:[%s1 + $0x18] sm:$0xff]
    %v69 = vld [vmem:[%s1 + $0x20] sm:$0xff]
    %v70 = vld [vmem:[%s1 + $0x28] sm:$0xff]
    %v71 = vld [vmem:[%s1 + $0x30] sm:$0xff]
    %v72 = vld [vmem:[%s1 + $0x38] sm:$0xff]
    %v73 = vld [vmem:[%s1 + $0x40] sm:$0xff]
    %v74 = vld [vmem:[%s1 + $0x48] sm:$0xff]
    %v75 = vld [vmem:[%s1 + $0x50] sm:$0xff]
    %v76 = vld [vmem:[%s1 + $0x58] sm:$0xff]
    %v77 = vld [vmem:[%s1 + $0x60] sm:$0xff]
    %v78 = vld [vmem:[%s1 + $0x68] sm:$0xff]
    %v79 = vld [vmem:[%s1 + $0x70] sm:$0xff]
    %v80 = vld [vmem:[%s1 + $0x78] sm:$0xff]
    %v81 = vld [vmem:[%s1 + $0x80] sm:$0xff]
    %v82 = vld [vmem:[%s1 + $0x88] sm:$0xff]
    %v83 = vld [vmem:[%s1 + $0x90] sm:$0xff]
    %v84 = vld [vmem:[%s1 + $0x98] sm:$0xff]
    %v85 = vld [vmem:[%s1 + $0xa0] sm:$0xff]
    %v86 = vld [vmem:[%s1 + $0xa8] sm:$0xff]
    %v87 = vld [vmem:[%s1 + $0xb0] sm:$0xff]
    %v88 = vld [vmem:[%s1 + $0xb8] sm:$0xff]
    %v89 = vld [vmem:[%s1 + $0xc0] sm:$0xff]
    %v90 = vld [vmem:[%s1 + $0xc8] sm:$0xff]
    %v91 = vld [vmem:[%s1 + $0xd0] sm:$0xff]
    %v92 = vld [vmem:[%s1 + $0xd8] sm:$0xff]
    %v93 = vld [vmem:[%s1 + $0xe0] sm:$0xff]
    %v94 = vld [vmem:[%s1 + $0xe8] sm:$0xff]
    %v95 = vld [vmem:[%s1 + $0xf0] sm:$0xff]
    %v96 = vld [vmem:[%s1 + $0xf8] sm:$0xff]
    %v97 = vld [vmem:[%s1 + $0x100] sm:$0xff]
    %v98 = vld [vmem:[%s1 + $0x108] sm:$0xff]
    %v99 = vld [vmem:[%s1 + $0x110] sm:$0xff]
    %v100 = vld [vmem:[%s1 + $0x118] sm:$0xff]
    %v101 = vld [vmem:[%s1 + $0x120] sm:$0xff]
    %v102 = vld [vmem:[%s1 + $0x128] sm:$0xff]
    %v103 = vld [vmem:[%s1 + $0x130] sm:$0xff]
    %v104 = vld [vmem:[%s1 + $0x138] sm:$0xff]
    %v105 = vld [vmem:[%s1 + $0x140] sm:$0xff]
    %v106 = vld [vmem:[%s1 + $0x148] sm:$0xff]
    %v107 = vld [vmem:[%s1 + $0x150] sm:$0xff]
    %v108 = vld [vmem:[%s1 + $0x158] sm:$0xff]
    %v109 = vld [vmem:[%s1 + $0x160] sm:$0xff]
    %v110 = vld [vmem:[%s1 + $0x168] sm:$0xff]
    %v111 = vld [vmem:[%s1 + $0x170] sm:$0xff]
    %v112 = vld [vmem:[%s1 + $0x178] sm:$0xff]
    %v113 = vld [vmem:[%s1 + $0x180] sm:$0xff]
    %v114 = vld [vmem:[%s1 + $0x188] sm:$0xff]
    %v115 = vld [vmem:[%s1 + $0x190] sm:$0xff]
    %v116 = vld [vmem:[%s1 + $0x198] sm:$0xff]
    %v117 = vld [vmem:[%s1 + $0x1a0] sm:$0xff]
    %v118 = vld [vmem:[%s1 + $0x1a8] sm:$0xff]
    %v119 = vld [vmem:[%s1 + $0x1b0] sm:$0xff]
    %v120 = vld [vmem:[%s1 + $0x1b8] sm:$0xff]
    %v121 = vld [vmem:[%s1 + $0x1c0] sm:$0xff]
    %v122 = vld [vmem:[%s1 + $0x1c8] sm:$0xff]
    %v123 = vld [vmem:[%s1 + $0x1d0] sm:$0xff]
    %v124 = vld [vmem:[%s1 + $0x1d8] sm:$0xff]
    %v125 = vld [vmem:[%s1 + $0x1e0] sm:$0xff]
    %v126 = vld [vmem:[%s1 + $0x1e8] sm:$0xff]
    %v127 = vld [vmem:[%s1 + $0x1f0] sm:$0xff]
    %v128 = vld [vmem:[%s1 + $0x1f8] sm:$0xff]
    %v129 = vld [vmem:[%s1 + $0x200] sm:$0xff]
    %v130 = vld [vmem:[%s1 + $0x208] sm:$0xff]
    %v131 = vld [vmem:[%s1 + $0x210] sm:$0xff]
    %v132 = vld [vmem:[%s1 + $0x218] sm:$0xff]
    %v133 = vld [vmem:[%s1 + $0x220] sm:$0xff]
    %v134 = vld [vmem:[%s1 + $0x228] sm:$0xff]
    %v135 = vld [vmem:[%s1 + $0x230] sm:$0xff]
    %v136 = vld [vmem:[%s1 + $0x238] sm:$0xff]
    %v137 = vld [vmem:[%s1 + $0x240] sm:$0xff]
    %v138 = vld [vmem:[%s1 + $0x248] sm:$0xff]
    %v139 = vld [vmem:[%s1 + $0x250] sm:$0xff]
    %v140 = vld [vmem:[%s1 + $0x258] sm:$0xff]
    %v141 = vld [vmem:[%s1 + $0x260] sm:$0xff]
    %v142 = vld [vmem:[%s1 + $0x268] sm:$0xff]
    %v143 = vld [vmem:[%s1 + $0x270] sm:$0xff]
    %v144 = vld [vmem:[%s1 + $0x278] sm:$0xff]
    %v145 = vld [vmem:[%s1 + $0x280] sm:$0xff]
    %v146 = vld [vmem:[%s1 + $0x288] sm:$0xff]
    %v147 = vld [vmem:[%s1 + $0x290] sm:$0xff]
    %v148 = vld [vmem:[%s1 + $0x298] sm:$0xff]
    %v149 = vld [vmem:[%s1 + $0x2a0] sm:$0xff]
    %v150 = vld [vmem:[%s1 + $0x2a8] sm:$0xff]
    %v151 = vld [vmem:[%s1 + $0x2b0] sm:$0xff]
    %v152 = vld [vmem:[%s1 + $0x2b8] sm:$0xff]
    %v153 = vld [vmem:[%s1 + $0x2c0] sm:$0xff]
    %v154 = vld [vmem:[%s1 + $0x2c8] sm:$0xff]
    %v155 = vld [vmem:[%s1 + $0x2d0] sm:$0xff]
    %v156 = vld [vmem:[%s1 + $0x2d8] sm:$0xff]
    %v157 = vld [vmem:[%s1 + $0x2e0] sm:$0xff]
    %v158 = vld [vmem:[%s1 + $0x2e8] sm:$0xff]
    %v159 = vld [vmem:[%s1 + $0x2f0] sm:$0xff]
    %v160 = vld [vmem:[%s1 + $0x2f8] sm:$0xff]
    %v161 = vld [vmem:[%s1 + $0x300] sm:$0xff]
    %v162 = vld [vmem:[%s1 + $0x308] sm:$0xff]
    %v163 = vld [vmem:[%s1 + $0x310] sm:$0xff]
    %v164 = vld [vmem:[%s1 + $0x318] sm:$0xff]
    %v165 = vld [vmem:[%s1 + $0x320] sm:$0xff]
    %v166 = vld [vmem:[%s1 + $0x328] sm:$0xff]
    %v167 = vld [vmem:[%s1 + $0x330] sm:$0xff]
    %v168 = vld [vmem:[%s1 + $0x338] sm:$0xff]
    %v169 = vld [vmem:[%s1 + $0x340] sm:$0xff]
    %v170 = vld [vmem:[%s1 + $0x348] sm:$0xff]
    %v171 = vld [vmem:[%s1 + $0x350] sm:$0xff]
    %v172 = vld [vmem:[%s1 + $0x358] sm:$0xff]
    %v173 = vld [vmem:[%s1 + $0x360] sm:$0xff]
    %v174 = vld [vmem:[%s1 + $0x368] sm:$0xff]
    %v175 = vld [vmem:[%s1 + $0x370] sm:$0xff]
    %v176 = vld [vmem:[%s1 + $0x378] sm:$0xff]
    %v177 = vld [vmem:[%s1 + $0x380] sm:$0xff]
    %v178 = vld [vmem:[%s1 + $0x388] sm:$0xff]
    %v179 = vld [vmem:[%s1 + $0x390] sm:$0xff]
    %v180 = vld [vmem:[%s1 + $0x398] sm:$0xff]
    %v181 = vld [vmem:[%s1 + $0x3a0] sm:$0xff]
    %v182 = vld [vmem:[%s1 + $0x3a8] sm:$0xff]
    %v183 = vld [vmem:[%s1 + $0x3b0] sm:$0xff]
    %v184 = vld [vmem:[%s1 + $0x3b8] sm:$0xff]
    %v185 = vld [vmem:[%s1 + $0x3c0] sm:$0xff]
    %v186 = vld [vmem:[%s1 + $0x3c8] sm:$0xff]
    %v187 = vld [vmem:[%s1 + $0x3d0] sm:$0xff]
    %v188 = vld [vmem:[%s1 + $0x3d8] sm:$0xff]
    %v189 = vld [vmem:[%s1 + $0x3e0] sm:$0xff]
    %v190 = vld [vmem:[%s1 + $0x3e8] sm:$0xff]
    %v191 = vld [vmem:[%s1 + $0x3f0] sm:$0xff]
    %v192 = vld [vmem:[%s1 + $0x3f8] sm:$0xff]
    %v193 = vld [vmem:[%s2] sm:$0xf]
    %v195 = vperm.slane %v193, 0
    %v196 = vperm.slane %v193, 1
    %v197 = vperm.slane %v193, 2
    %v198 = vperm.slane %v193, 3
    %203 = vmatpush.msra.mxu0 %v125
    %204 = vmatpush.msra.mxu0 %v121
    %205 = vmatpush.msra.mxu0 %v117
    %206 = vmatpush.msra.mxu0 %v113
    %207 = vmatpush.msra.mxu0 %v109
    %208 = vmatpush.msra.mxu0 %v105
    %209 = vmatpush.msra.mxu0 %v101
    %210 = vmatpush.msra.mxu0 %v97
    %211 = vmatpush.msra.mxu0 %v93
    %212 = vmatpush.msra.mxu0 %v89
    %213 = vmatpush.msra.mxu0 %v85
    %214 = vmatpush.msra.mxu0 %v81
    %215 = vmatpush.msra.mxu0 %v77
    %216 = vmatpush.msra.mxu0 %v73
    %217 = vmatpush.msra.mxu0 %v69
    %218 = vmatpush.msra.mxu0 %v65
    %219 = vmatmul.f32.gmra.mxu0 %v15
    %v220 = vpop.f32.mrf.mxu0
    %v221 = vadd.f32 %v195, %v220
    %222 = vmatmul.f32.gmra.mxu0 %v17
    %v223 = vpop.f32.mrf.mxu0
    %v224 = vadd.f32 %v195, %v223
    %225 = vmatmul.f32.gmra.mxu0 %v19
    %v226 = vpop.f32.mrf.mxu0
    %v227 = vadd.f32 %v195, %v226
    %228 = vmatmul.f32.gmra.mxu0 %v21
    %v229 = vpop.f32.mrf.mxu0
    %v230 = vadd.f32 %v195, %v229
    %231 = vmatmul.f32.gmra.mxu0 %v23
    %v232 = vpop.f32.mrf.mxu0
    %v233 = vadd.f32 %v195, %v232
    %234 = vmatmul.f32.gmra.mxu0 %v25
    %v235 = vpop.f32.mrf.mxu0
    %v236 = vadd.f32 %v195, %v235
    %237 = vmatmul.f32.gmra.mxu0 %v27
    %v238 = vpop.f32.mrf.mxu0
    %v239 = vadd.f32 %v195, %v238
    %240 = vmatmul.f32.gmra.mxu0 %v29
    %v241 = vpop.f32.mrf.mxu0
    %v242 = vadd.f32 %v195, %v241
    %243 = vmatmul.f32.gmra.mxu0 %v31
    %v244 = vpop.f32.mrf.mxu0
    %v245 = vadd.f32 %v195, %v244
    %246 = vmatmul.f32.gmra.mxu0 %v33
    %v247 = vpop.f32.mrf.mxu0
    %v248 = vadd.f32 %v195, %v247
    %249 = vmatmul.f32.gmra.mxu0 %v35
    %v250 = vpop.f32.mrf.mxu0
    %v251 = vadd.f32 %v195, %v250
    %252 = vmatmul.f32.gmra.mxu0 %v37
    %v253 = vpop.f32.mrf.mxu0
    %v254 = vadd.f32 %v195, %v253
    %255 = vmatmul.f32.gmra.mxu0 %v39
    %v256 = vpop.f32.mrf.mxu0
    %v257 = vadd.f32 %v195, %v256
    %258 = vmatmul.f32.gmra.mxu0 %v41
    %v259 = vpop.f32.mrf.mxu0
    %v260 = vadd.f32 %v195, %v259
    %261 = vmatmul.f32.gmra.mxu0 %v43
    %v262 = vpop.f32.mrf.mxu0
    %v263 = vadd.f32 %v195, %v262
    %264 = vmatmul.f32.gmra.mxu0 %v45
    %v265 = vpop.f32.mrf.mxu0
    %v266 = vadd.f32 %v195, %v265
    %267 = vmatmul.f32.gmra.mxu0 %v47
    %v268 = vpop.f32.mrf.mxu0
    %v269 = vadd.f32 %v195, %v268
    %270 = vmatmul.f32.gmra.mxu0 %v49
    %v271 = vpop.f32.mrf.mxu0
    %v272 = vadd.f32 %v195, %v271
    %273 = vmatmul.f32.gmra.mxu0 %v51
    %v274 = vpop.f32.mrf.mxu0
    %v275 = vadd.f32 %v195, %v274
    %276 = vmatmul.f32.gmra.mxu0 %v53
    %v277 = vpop.f32.mrf.mxu0
    %v278 = vadd.f32 %v195, %v277
    %279 = vmatmul.f32.gmra.mxu0 %v55
    %v280 = vpop.f32.mrf.mxu0
    %v281 = vadd.f32 %v195, %v280
    %282 = vmatmul.f32.gmra.mxu0 %v57
    %v283 = vpop.f32.mrf.mxu0
    %v284 = vadd.f32 %v195, %v283
    %285 = vmatmul.f32.gmra.mxu0 %v59
    %v286 = vpop.f32.mrf.mxu0
    %v287 = vadd.f32 %v195, %v286
    %288 = vmatmul.f32.gmra.mxu0 %v61
    %v289 = vpop.f32.mrf.mxu0
    %v290 = vadd.f32 %v195, %v289
    %291 = vmatmul.f32.gmra.mxu0 %v63
    %v292 = vpop.f32.mrf.mxu0
    %v293 = vadd.f32 %v195, %v292
    %294 = vdwg.mxu0
    %295 = vmatpush.msra.mxu0 %v189
    %296 = vmatpush.msra.mxu0 %v185
    %297 = vmatpush.msra.mxu0 %v181
    %298 = vmatpush.msra.mxu0 %v177
    %299 = vmatpush.msra.mxu0 %v173
    %300 = vmatpush.msra.mxu0 %v169
    %301 = vmatpush.msra.mxu0 %v165
    %302 = vmatpush.msra.mxu0 %v161
    %303 = vmatpush.msra.mxu0 %v157
    %304 = vmatpush.msra.mxu0 %v153
    %305 = vmatpush.msra.mxu0 %v149
    %306 = vmatpush.msra.mxu0 %v145
    %307 = vmatpush.msra.mxu0 %v141
    %308 = vmatpush.msra.mxu0 %v137
    %309 = vmatpush.msra.mxu0 %v133
    %310 = vmatpush.msra.mxu0 %v129
    %311 = vmatmul.f32.gmra.mxu0 %v16
    %v312 = vpop.f32.mrf.mxu0
    %v313 = vadd.f32 %v221, %v312
    %314 = vmatmul.f32.gmra.mxu0 %v18
    %v315 = vpop.f32.mrf.mxu0
    %v316 = vadd.f32 %v224, %v315
    %317 = vmatmul.f32.gmra.mxu0 %v20
    %v318 = vpop.f32.mrf.mxu0
    %v319 = vadd.f32 %v227, %v318
    %320 = vmatmul.f32.gmra.mxu0 %v22
    %v321 = vpop.f32.mrf.mxu0
    %v322 = vadd.f32 %v230, %v321
    %323 = vmatmul.f32.gmra.mxu0 %v24
    %v324 = vpop.f32.mrf.mxu0
    %v325 = vadd.f32 %v233, %v324
    %326 = vmatmul.f32.gmra.mxu0 %v26
    %v327 = vpop.f32.mrf.mxu0
    %v328 = vadd.f32 %v236, %v327
    %329 = vmatmul.f32.gmra.mxu0 %v28
    %v330 = vpop.f32.mrf.mxu0
    %v331 = vadd.f32 %v239, %v330
    %332 = vmatmul.f32.gmra.mxu0 %v30
    %v333 = vpop.f32.mrf.mxu0
    %v334 = vadd.f32 %v242, %v333
    %335 = vmatmul.f32.gmra.mxu0 %v32
    %v336 = vpop.f32.mrf.mxu0
    %v337 = vadd.f32 %v245, %v336
    %338 = vmatmul.f32.gmra.mxu0 %v34
    %v339 = vpop.f32.mrf.mxu0
    %v340 = vadd.f32 %v248, %v339
    %341 = vmatmul.f32.gmra.mxu0 %v36
    %v342 = vpop.f32.mrf.mxu0
    %v343 = vadd.f32 %v251, %v342
    %344 = vmatmul.f32.gmra.mxu0 %v38
    %v345 = vpop.f32.mrf.mxu0
    %v346 = vadd.f32 %v254, %v345
    %347 = vmatmul.f32.gmra.mxu0 %v40
    %v348 = vpop.f32.mrf.mxu0
    %v349 = vadd.f32 %v257, %v348
    %350 = vmatmul.f32.gmra.mxu0 %v42
    %v351 = vpop.f32.mrf.mxu0
    %v352 = vadd.f32 %v260, %v351
    %353 = vmatmul.f32.gmra.mxu0 %v44
    %v354 = vpop.f32.mrf.mxu0
    %v355 = vadd.f32 %v263, %v354
    %356 = vmatmul.f32.gmra.mxu0 %v46
    %v357 = vpop.f32.mrf.mxu0
    %v358 = vadd.f32 %v266, %v357
    %359 = vmatmul.f32.gmra.mxu0 %v48
    %v360 = vpop.f32.mrf.mxu0
    %v361 = vadd.f32 %v269, %v360
    %362 = vmatmul.f32.gmra.mxu0 %v50
    %v363 = vpop.f32.mrf.mxu0
    %v364 = vadd.f32 %v272, %v363
    %365 = vmatmul.f32.gmra.mxu0 %v52
    %v366 = vpop.f32.mrf.mxu0
    %v367 = vadd.f32 %v275, %v366
    %368 = vmatmul.f32.gmra.mxu0 %v54
    %v369 = vpop.f32.mrf.mxu0
    %v370 = vadd.f32 %v278, %v369
    %371 = vmatmul.f32.gmra.mxu0 %v56
    %v372 = vpop.f32.mrf.mxu0
    %v373 = vadd.f32 %v281, %v372
    %374 = vmatmul.f32.gmra.mxu0 %v58
    %v375 = vpop.f32.mrf.mxu0
    %v376 = vadd.f32 %v284, %v375
    %377 = vmatmul.f32.gmra.mxu0 %v60
    %v378 = vpop.f32.mrf.mxu0
    %v379 = vadd.f32 %v287, %v378
    %380 = vmatmul.f32.gmra.mxu0 %v62
    %v381 = vpop.f32.mrf.mxu0
    %v382 = vadd.f32 %v290, %v381
    %383 = vmatmul.f32.gmra.mxu0 %v64
    %v384 = vpop.f32.mrf.mxu0
    %v385 = vadd.f32 %v293, %v384
    %386 = vdwg.mxu0
    %387 = vmatpush.msra.mxu0 %v126
    %388 = vmatpush.msra.mxu0 %v122
    %389 = vmatpush.msra.mxu0 %v118
    %390 = vmatpush.msra.mxu0 %v114
    %391 = vmatpush.msra.mxu0 %v110
    %392 = vmatpush.msra.mxu0 %v106
    %393 = vmatpush.msra.mxu0 %v102
    %394 = vmatpush.msra.mxu0 %v98
    %395 = vmatpush.msra.mxu0 %v94
    %396 = vmatpush.msra.mxu0 %v90
    %397 = vmatpush.msra.mxu0 %v86
    %398 = vmatpush.msra.mxu0 %v82
    %399 = vmatpush.msra.mxu0 %v78
    %400 = vmatpush.msra.mxu0 %v74
    %401 = vmatpush.msra.mxu0 %v70
    %402 = vmatpush.msra.mxu0 %v66
    %403 = vmatmul.f32.gmra.mxu0 %v15
    %v404 = vpop.f32.mrf.mxu0
    %v405 = vadd.f32 %v196, %v404
    %406 = vmatmul.f32.gmra.mxu0 %v17
    %v407 = vpop.f32.mrf.mxu0
    %v408 = vadd.f32 %v196, %v407
    %409 = vmatmul.f32.gmra.mxu0 %v19
    %v410 = vpop.f32.mrf.mxu0
    %v411 = vadd.f32 %v196, %v410
    %412 = vmatmul.f32.gmra.mxu0 %v21
    %v413 = vpop.f32.mrf.mxu0
    %v414 = vadd.f32 %v196, %v413
    %415 = vmatmul.f32.gmra.mxu0 %v23
    %v416 = vpop.f32.mrf.mxu0
    %v417 = vadd.f32 %v196, %v416
    %418 = vmatmul.f32.gmra.mxu0 %v25
    %v419 = vpop.f32.mrf.mxu0
    %v420 = vadd.f32 %v196, %v419
    %421 = vmatmul.f32.gmra.mxu0 %v27
    %v422 = vpop.f32.mrf.mxu0
    %v423 = vadd.f32 %v196, %v422
    %424 = vmatmul.f32.gmra.mxu0 %v29
    %v425 = vpop.f32.mrf.mxu0
    %v426 = vadd.f32 %v196, %v425
    %427 = vmatmul.f32.gmra.mxu0 %v31
    %v428 = vpop.f32.mrf.mxu0
    %v429 = vadd.f32 %v196, %v428
    %430 = vmatmul.f32.gmra.mxu0 %v33
    %v431 = vpop.f32.mrf.mxu0
    %v432 = vadd.f32 %v196, %v431
    %433 = vmatmul.f32.gmra.mxu0 %v35
    %v434 = vpop.f32.mrf.mxu0
    %v435 = vadd.f32 %v196, %v434
    %436 = vmatmul.f32.gmra.mxu0 %v37
    %v437 = vpop.f32.mrf.mxu0
    %v438 = vadd.f32 %v196, %v437
    %439 = vmatmul.f32.gmra.mxu0 %v39
    %v440 = vpop.f32.mrf.mxu0
    %v441 = vadd.f32 %v196, %v440
    %442 = vmatmul.f32.gmra.mxu0 %v41
    %v443 = vpop.f32.mrf.mxu0
    %v444 = vadd.f32 %v196, %v443
    %445 = vmatmul.f32.gmra.mxu0 %v43
    %v446 = vpop.f32.mrf.mxu0
    %v447 = vadd.f32 %v196, %v446
    %448 = vmatmul.f32.gmra.mxu0 %v45
    %v449 = vpop.f32.mrf.mxu0
    %v450 = vadd.f32 %v196, %v449
    %451 = vmatmul.f32.gmra.mxu0 %v47
    %v452 = vpop.f32.mrf.mxu0
    %v453 = vadd.f32 %v196, %v452
    %454 = vmatmul.f32.gmra.mxu0 %v49
    %v455 = vpop.f32.mrf.mxu0
    %v456 = vadd.f32 %v196, %v455
    %457 = vmatmul.f32.gmra.mxu0 %v51
    %v458 = vpop.f32.mrf.mxu0
    %v459 = vadd.f32 %v196, %v458
    %460 = vmatmul.f32.gmra.mxu0 %v53
    %v461 = vpop.f32.mrf.mxu0
    %v462 = vadd.f32 %v196, %v461
    %463 = vmatmul.f32.gmra.mxu0 %v55
    %v464 = vpop.f32.mrf.mxu0
    %v465 = vadd.f32 %v196, %v464
    %466 = vmatmul.f32.gmra.mxu0 %v57
    %v467 = vpop.f32.mrf.mxu0
    %v468 = vadd.f32 %v196, %v467
    %469 = vmatmul.f32.gmra.mxu0 %v59
    %v470 = vpop.f32.mrf.mxu0
    %v471 = vadd.f32 %v196, %v470
    %472 = vmatmul.f32.gmra.mxu0 %v61
    %v473 = vpop.f32.mrf.mxu0
    %v474 = vadd.f32 %v196, %v473
    %475 = vmatmul.f32.gmra.mxu0 %v63
    %v476 = vpop.f32.mrf.mxu0
    %v477 = vadd.f32 %v196, %v476
    %478 = vdwg.mxu0
    %479 = vmatpush.msra.mxu0 %v190
    %480 = vmatpush.msra.mxu0 %v186
    %481 = vmatpush.msra.mxu0 %v182
    %482 = vmatpush.msra.mxu0 %v178
    %483 = vmatpush.msra.mxu0 %v174
    %484 = vmatpush.msra.mxu0 %v170
    %485 = vmatpush.msra.mxu0 %v166
    %486 = vmatpush.msra.mxu0 %v162
    %487 = vmatpush.msra.mxu0 %v158
    %488 = vmatpush.msra.mxu0 %v154
    %489 = vmatpush.msra.mxu0 %v150
    %490 = vmatpush.msra.mxu0 %v146
    %491 = vmatpush.msra.mxu0 %v142
    %492 = vmatpush.msra.mxu0 %v138
    %493 = vmatpush.msra.mxu0 %v134
    %494 = vmatpush.msra.mxu0 %v130
    %495 = vmatmul.f32.gmra.mxu0 %v16
    %v496 = vpop.f32.mrf.mxu0
    %v497 = vadd.f32 %v405, %v496
    %498 = vmatmul.f32.gmra.mxu0 %v18
    %v499 = vpop.f32.mrf.mxu0
    %v500 = vadd.f32 %v408, %v499
    %501 = vmatmul.f32.gmra.mxu0 %v20
    %v502 = vpop.f32.mrf.mxu0
    %v503 = vadd.f32 %v411, %v502
    %504 = vmatmul.f32.gmra.mxu0 %v22
    %v505 = vpop.f32.mrf.mxu0
    %v506 = vadd.f32 %v414, %v505
    %507 = vmatmul.f32.gmra.mxu0 %v24
    %v508 = vpop.f32.mrf.mxu0
    %v509 = vadd.f32 %v417, %v508
    %510 = vmatmul.f32.gmra.mxu0 %v26
    %v511 = vpop.f32.mrf.mxu0
    %v512 = vadd.f32 %v420, %v511
    %513 = vmatmul.f32.gmra.mxu0 %v28
    %v514 = vpop.f32.mrf.mxu0
    %v515 = vadd.f32 %v423, %v514
    %516 = vmatmul.f32.gmra.mxu0 %v30
    %v517 = vpop.f32.mrf.mxu0
    %v518 = vadd.f32 %v426, %v517
    %519 = vmatmul.f32.gmra.mxu0 %v32
    %v520 = vpop.f32.mrf.mxu0
    %v521 = vadd.f32 %v429, %v520
    %522 = vmatmul.f32.gmra.mxu0 %v34
    %v523 = vpop.f32.mrf.mxu0
    %v524 = vadd.f32 %v432, %v523
    %525 = vmatmul.f32.gmra.mxu0 %v36
    %v526 = vpop.f32.mrf.mxu0
    %v527 = vadd.f32 %v435, %v526
    %528 = vmatmul.f32.gmra.mxu0 %v38
    %v529 = vpop.f32.mrf.mxu0
    %v530 = vadd.f32 %v438, %v529
    %531 = vmatmul.f32.gmra.mxu0 %v40
    %v532 = vpop.f32.mrf.mxu0
    %v533 = vadd.f32 %v441, %v532
    %534 = vmatmul.f32.gmra.mxu0 %v42
    %v535 = vpop.f32.mrf.mxu0
    %v536 = vadd.f32 %v444, %v535
    %537 = vmatmul.f32.gmra.mxu0 %v44
    %v538 = vpop.f32.mrf.mxu0
    %v539 = vadd.f32 %v447, %v538
    %540 = vmatmul.f32.gmra.mxu0 %v46
    %v541 = vpop.f32.mrf.mxu0
    %v542 = vadd.f32 %v450, %v541
    %543 = vmatmul.f32.gmra.mxu0 %v48
    %v544 = vpop.f32.mrf.mxu0
    %v545 = vadd.f32 %v453, %v544
    %546 = vmatmul.f32.gmra.mxu0 %v50
    %v547 = vpop.f32.mrf.mxu0
    %v548 = vadd.f32 %v456, %v547
    %549 = vmatmul.f32.gmra.mxu0 %v52
    %v550 = vpop.f32.mrf.mxu0
    %v551 = vadd.f32 %v459, %v550
    %552 = vmatmul.f32.gmra.mxu0 %v54
    %v553 = vpop.f32.mrf.mxu0
    %v554 = vadd.f32 %v462, %v553
    %555 = vmatmul.f32.gmra.mxu0 %v56
    %v556 = vpop.f32.mrf.mxu0
    %v557 = vadd.f32 %v465, %v556
    %558 = vmatmul.f32.gmra.mxu0 %v58
    %v559 = vpop.f32.mrf.mxu0
    %v560 = vadd.f32 %v468, %v559
    %561 = vmatmul.f32.gmra.mxu0 %v60
    %v562 = vpop.f32.mrf.mxu0
    %v563 = vadd.f32 %v471, %v562
    %564 = vmatmul.f32.gmra.mxu0 %v62
    %v565 = vpop.f32.mrf.mxu0
    %v566 = vadd.f32 %v474, %v565
    %567 = vmatmul.f32.gmra.mxu0 %v64
    %v568 = vpop.f32.mrf.mxu0
    %v569 = vadd.f32 %v477, %v568
    %570 = vdwg.mxu0
    %571 = vmatpush.msra.mxu0 %v127
    %572 = vmatpush.msra.mxu0 %v123
    %573 = vmatpush.msra.mxu0 %v119
    %574 = vmatpush.msra.mxu0 %v115
    %575 = vmatpush.msra.mxu0 %v111
    %576 = vmatpush.msra.mxu0 %v107
    %577 = vmatpush.msra.mxu0 %v103
    %578 = vmatpush.msra.mxu0 %v99
    %579 = vmatpush.msra.mxu0 %v95
    %580 = vmatpush.msra.mxu0 %v91
    %581 = vmatpush.msra.mxu0 %v87
    %582 = vmatpush.msra.mxu0 %v83
    %583 = vmatpush.msra.mxu0 %v79
    %584 = vmatpush.msra.mxu0 %v75
    %585 = vmatpush.msra.mxu0 %v71
    %586 = vmatpush.msra.mxu0 %v67
    %587 = vmatmul.f32.gmra.mxu0 %v15
    %v588 = vpop.f32.mrf.mxu0
    %v589 = vadd.f32 %v197, %v588
    %590 = vmatmul.f32.gmra.mxu0 %v17
    %v591 = vpop.f32.mrf.mxu0
    %v592 = vadd.f32 %v197, %v591
    %593 = vmatmul.f32.gmra.mxu0 %v19
    %v594 = vpop.f32.mrf.mxu0
    %v595 = vadd.f32 %v197, %v594
    %596 = vmatmul.f32.gmra.mxu0 %v21
    %v597 = vpop.f32.mrf.mxu0
    %v598 = vadd.f32 %v197, %v597
    %599 = vmatmul.f32.gmra.mxu0 %v23
    %v600 = vpop.f32.mrf.mxu0
    %v601 = vadd.f32 %v197, %v600
    %602 = vmatmul.f32.gmra.mxu0 %v25
    %v603 = vpop.f32.mrf.mxu0
    %v604 = vadd.f32 %v197, %v603
    %605 = vmatmul.f32.gmra.mxu0 %v27
    %v606 = vpop.f32.mrf.mxu0
    %v607 = vadd.f32 %v197, %v606
    %608 = vmatmul.f32.gmra.mxu0 %v29
    %v609 = vpop.f32.mrf.mxu0
    %v610 = vadd.f32 %v197, %v609
    %611 = vmatmul.f32.gmra.mxu0 %v31
    %v612 = vpop.f32.mrf.mxu0
    %v613 = vadd.f32 %v197, %v612
    %614 = vmatmul.f32.gmra.mxu0 %v33
    %v615 = vpop.f32.mrf.mxu0
    %v616 = vadd.f32 %v197, %v615
    %617 = vmatmul.f32.gmra.mxu0 %v35
    %v618 = vpop.f32.mrf.mxu0
    %v619 = vadd.f32 %v197, %v618
    %620 = vmatmul.f32.gmra.mxu0 %v37
    %v621 = vpop.f32.mrf.mxu0
    %v622 = vadd.f32 %v197, %v621
    %623 = vmatmul.f32.gmra.mxu0 %v39
    %v624 = vpop.f32.mrf.mxu0
    %v625 = vadd.f32 %v197, %v624
    %626 = vmatmul.f32.gmra.mxu0 %v41
    %v627 = vpop.f32.mrf.mxu0
    %v628 = vadd.f32 %v197, %v627
    %629 = vmatmul.f32.gmra.mxu0 %v43
    %v630 = vpop.f32.mrf.mxu0
    %v631 = vadd.f32 %v197, %v630
    %632 = vmatmul.f32.gmra.mxu0 %v45
    %v633 = vpop.f32.mrf.mxu0
    %v634 = vadd.f32 %v197, %v633
    %635 = vmatmul.f32.gmra.mxu0 %v47
    %v636 = vpop.f32.mrf.mxu0
    %v637 = vadd.f32 %v197, %v636
    %638 = vmatmul.f32.gmra.mxu0 %v49
    %v639 = vpop.f32.mrf.mxu0
    %v640 = vadd.f32 %v197, %v639
    %641 = vmatmul.f32.gmra.mxu0 %v51
    %v642 = vpop.f32.mrf.mxu0
    %v643 = vadd.f32 %v197, %v642
    %644 = vmatmul.f32.gmra.mxu0 %v53
    %v645 = vpop.f32.mrf.mxu0
    %v646 = vadd.f32 %v197, %v645
    %647 = vmatmul.f32.gmra.mxu0 %v55
    %v648 = vpop.f32.mrf.mxu0
    %v649 = vadd.f32 %v197, %v648
    %650 = vmatmul.f32.gmra.mxu0 %v57
    %v651 = vpop.f32.mrf.mxu0
    %v652 = vadd.f32 %v197, %v651
    %653 = vmatmul.f32.gmra.mxu0 %v59
    %v654 = vpop.f32.mrf.mxu0
    %v655 = vadd.f32 %v197, %v654
    %656 = vmatmul.f32.gmra.mxu0 %v61
    %v657 = vpop.f32.mrf.mxu0
    %v658 = vadd.f32 %v197, %v657
    %659 = vmatmul.f32.gmra.mxu0 %v63
    %v660 = vpop.f32.mrf.mxu0
    %v661 = vadd.f32 %v197, %v660
    %662 = vdwg.mxu0
    %663 = vmatpush.msra.mxu0 %v191
    %664 = vmatpush.msra.mxu0 %v187
    %665 = vmatpush.msra.mxu0 %v183
    %666 = vmatpush.msra.mxu0 %v179
    %667 = vmatpush.msra.mxu0 %v175
    %668 = vmatpush.msra.mxu0 %v171
    %669 = vmatpush.msra.mxu0 %v167
    %670 = vmatpush.msra.mxu0 %v163
    %671 = vmatpush.msra.mxu0 %v159
    %672 = vmatpush.msra.mxu0 %v155
    %673 = vmatpush.msra.mxu0 %v151
    %674 = vmatpush.msra.mxu0 %v147
    %675 = vmatpush.msra.mxu0 %v143
    %676 = vmatpush.msra.mxu0 %v139
    %677 = vmatpush.msra.mxu0 %v135
    %678 = vmatpush.msra.mxu0 %v131
    %679 = vmatmul.f32.gmra.mxu0 %v16
    %v680 = vpop.f32.mrf.mxu0
    %v681 = vadd.f32 %v589, %v680
    %682 = vmatmul.f32.gmra.mxu0 %v18
    %v683 = vpop.f32.mrf.mxu0
    %v684 = vadd.f32 %v592, %v683
    %685 = vmatmul.f32.gmra.mxu0 %v20
    %v686 = vpop.f32.mrf.mxu0
    %v687 = vadd.f32 %v595, %v686
    %688 = vmatmul.f32.gmra.mxu0 %v22
    %v689 = vpop.f32.mrf.mxu0
    %v690 = vadd.f32 %v598, %v689
    %691 = vmatmul.f32.gmra.mxu0 %v24
    %v692 = vpop.f32.mrf.mxu0
    %v693 = vadd.f32 %v601, %v692
    %694 = vmatmul.f32.gmra.mxu0 %v26
    %v695 = vpop.f32.mrf.mxu0
    %v696 = vadd.f32 %v604, %v695
    %697 = vmatmul.f32.gmra.mxu0 %v28
    %v698 = vpop.f32.mrf.mxu0
    %v699 = vadd.f32 %v607, %v698
    %700 = vmatmul.f32.gmra.mxu0 %v30
    %v701 = vpop.f32.mrf.mxu0
    %v702 = vadd.f32 %v610, %v701
    %703 = vmatmul.f32.gmra.mxu0 %v32
    %v704 = vpop.f32.mrf.mxu0
    %v705 = vadd.f32 %v613, %v704
    %706 = vmatmul.f32.gmra.mxu0 %v34
    %v707 = vpop.f32.mrf.mxu0
    %v708 = vadd.f32 %v616, %v707
    %709 = vmatmul.f32.gmra.mxu0 %v36
    %v710 = vpop.f32.mrf.mxu0
    %v711 = vadd.f32 %v619, %v710
    %712 = vmatmul.f32.gmra.mxu0 %v38
    %v713 = vpop.f32.mrf.mxu0
    %v714 = vadd.f32 %v622, %v713
    %715 = vmatmul.f32.gmra.mxu0 %v40
    %v716 = vpop.f32.mrf.mxu0
    %v717 = vadd.f32 %v625, %v716
    %718 = vmatmul.f32.gmra.mxu0 %v42
    %v719 = vpop.f32.mrf.mxu0
    %v720 = vadd.f32 %v628, %v719
    %721 = vmatmul.f32.gmra.mxu0 %v44
    %v722 = vpop.f32.mrf.mxu0
    %v723 = vadd.f32 %v631, %v722
    %724 = vmatmul.f32.gmra.mxu0 %v46
    %v725 = vpop.f32.mrf.mxu0
    %v726 = vadd.f32 %v634, %v725
    %727 = vmatmul.f32.gmra.mxu0 %v48
    %v728 = vpop.f32.mrf.mxu0
    %v729 = vadd.f32 %v637, %v728
    %730 = vmatmul.f32.gmra.mxu0 %v50
    %v731 = vpop.f32.mrf.mxu0
    %v732 = vadd.f32 %v640, %v731
    %733 = vmatmul.f32.gmra.mxu0 %v52
    %v734 = vpop.f32.mrf.mxu0
    %v735 = vadd.f32 %v643, %v734
    %736 = vmatmul.f32.gmra.mxu0 %v54
    %v737 = vpop.f32.mrf.mxu0
    %v738 = vadd.f32 %v646, %v737
    %739 = vmatmul.f32.gmra.mxu0 %v56
    %v740 = vpop.f32.mrf.mxu0
    %v741 = vadd.f32 %v649, %v740
    %742 = vmatmul.f32.gmra.mxu0 %v58
    %v743 = vpop.f32.mrf.mxu0
    %v744 = vadd.f32 %v652, %v743
    %745 = vmatmul.f32.gmra.mxu0 %v60
    %v746 = vpop.f32.mrf.mxu0
    %v747 = vadd.f32 %v655, %v746
    %748 = vmatmul.f32.gmra.mxu0 %v62
    %v749 = vpop.f32.mrf.mxu0
    %v750 = vadd.f32 %v658, %v749
    %751 = vmatmul.f32.gmra.mxu0 %v64
    %v752 = vpop.f32.mrf.mxu0
    %v753 = vadd.f32 %v661, %v752
    %754 = vdwg.mxu0
    %755 = vmatpush.msra.mxu0 %v128
    %756 = vmatpush.msra.mxu0 %v124
    %757 = vmatpush.msra.mxu0 %v120
    %758 = vmatpush.msra.mxu0 %v116
    %759 = vmatpush.msra.mxu0 %v112
    %760 = vmatpush.msra.mxu0 %v108
    %761 = vmatpush.msra.mxu0 %v104
    %762 = vmatpush.msra.mxu0 %v100
    %763 = vmatpush.msra.mxu0 %v96
    %764 = vmatpush.msra.mxu0 %v92
    %765 = vmatpush.msra.mxu0 %v88
    %766 = vmatpush.msra.mxu0 %v84
    %767 = vmatpush.msra.mxu0 %v80
    %768 = vmatpush.msra.mxu0 %v76
    %769 = vmatpush.msra.mxu0 %v72
    %770 = vmatpush.msra.mxu0 %v68
    %771 = vmatmul.f32.gmra.mxu0 %v15
    %v772 = vpop.f32.mrf.mxu0
    %v773 = vadd.f32 %v198, %v772
    %774 = vmatmul.f32.gmra.mxu0 %v17
    %v775 = vpop.f32.mrf.mxu0
    %v776 = vadd.f32 %v198, %v775
    %777 = vmatmul.f32.gmra.mxu0 %v19
    %v778 = vpop.f32.mrf.mxu0
    %v779 = vadd.f32 %v198, %v778
    %780 = vmatmul.f32.gmra.mxu0 %v21
    %v781 = vpop.f32.mrf.mxu0
    %v782 = vadd.f32 %v198, %v781
    %783 = vmatmul.f32.gmra.mxu0 %v23
    %v784 = vpop.f32.mrf.mxu0
    %v785 = vadd.f32 %v198, %v784
    %786 = vmatmul.f32.gmra.mxu0 %v25
    %v787 = vpop.f32.mrf.mxu0
    %v788 = vadd.f32 %v198, %v787
    %789 = vmatmul.f32.gmra.mxu0 %v27
    %v790 = vpop.f32.mrf.mxu0
    %v791 = vadd.f32 %v198, %v790
    %792 = vmatmul.f32.gmra.mxu0 %v29
    %v793 = vpop.f32.mrf.mxu0
    %v794 = vadd.f32 %v198, %v793
    %795 = vmatmul.f32.gmra.mxu0 %v31
    %v796 = vpop.f32.mrf.mxu0
    %v797 = vadd.f32 %v198, %v796
    %798 = vmatmul.f32.gmra.mxu0 %v33
    %v799 = vpop.f32.mrf.mxu0
    %v800 = vadd.f32 %v198, %v799
    %801 = vmatmul.f32.gmra.mxu0 %v35
    %v802 = vpop.f32.mrf.mxu0
    %v803 = vadd.f32 %v198, %v802
    %804 = vmatmul.f32.gmra.mxu0 %v37
    %v805 = vpop.f32.mrf.mxu0
    %v806 = vadd.f32 %v198, %v805
    %807 = vmatmul.f32.gmra.mxu0 %v39
    %v808 = vpop.f32.mrf.mxu0
    %v809 = vadd.f32 %v198, %v808
    %810 = vmatmul.f32.gmra.mxu0 %v41
    %v811 = vpop.f32.mrf.mxu0
    %v812 = vadd.f32 %v198, %v811
    %813 = vmatmul.f32.gmra.mxu0 %v43
    %v814 = vpop.f32.mrf.mxu0
    %v815 = vadd.f32 %v198, %v814
    %816 = vmatmul.f32.gmra.mxu0 %v45
    %v817 = vpop.f32.mrf.mxu0
    %v818 = vadd.f32 %v198, %v817
    %819 = vmatmul.f32.gmra.mxu0 %v47
    %v820 = vpop.f32.mrf.mxu0
    %v821 = vadd.f32 %v198, %v820
    %822 = vmatmul.f32.gmra.mxu0 %v49
    %v823 = vpop.f32.mrf.mxu0
    %v824 = vadd.f32 %v198, %v823
    %825 = vmatmul.f32.gmra.mxu0 %v51
    %v826 = vpop.f32.mrf.mxu0
    %v827 = vadd.f32 %v198, %v826
    %828 = vmatmul.f32.gmra.mxu0 %v53
    %v829 = vpop.f32.mrf.mxu0
    %v830 = vadd.f32 %v198, %v829
    %831 = vmatmul.f32.gmra.mxu0 %v55
    %v832 = vpop.f32.mrf.mxu0
    %v833 = vadd.f32 %v198, %v832
    %834 = vmatmul.f32.gmra.mxu0 %v57
    %v835 = vpop.f32.mrf.mxu0
    %v836 = vadd.f32 %v198, %v835
    %837 = vmatmul.f32.gmra.mxu0 %v59
    %v838 = vpop.f32.mrf.mxu0
    %v839 = vadd.f32 %v198, %v838
    %840 = vmatmul.f32.gmra.mxu0 %v61
    %v841 = vpop.f32.mrf.mxu0
    %v842 = vadd.f32 %v198, %v841
    %843 = vmatmul.f32.gmra.mxu0 %v63
    %v844 = vpop.f32.mrf.mxu0
    %v845 = vadd.f32 %v198, %v844
    %846 = vdwg.mxu0
    %847 = vmatpush.msra.mxu0 %v192
    %848 = vmatpush.msra.mxu0 %v188
    %849 = vmatpush.msra.mxu0 %v184
    %850 = vmatpush.msra.mxu0 %v180
    %851 = vmatpush.msra.mxu0 %v176
    %852 = vmatpush.msra.mxu0 %v172
    %853 = vmatpush.msra.mxu0 %v168
    %854 = vmatpush.msra.mxu0 %v164
    %855 = vmatpush.msra.mxu0 %v160
    %856 = vmatpush.msra.mxu0 %v156
    %857 = vmatpush.msra.mxu0 %v152
    %858 = vmatpush.msra.mxu0 %v148
    %859 = vmatpush.msra.mxu0 %v144
    %860 = vmatpush.msra.mxu0 %v140
    %861 = vmatpush.msra.mxu0 %v136
    %862 = vmatpush.msra.mxu0 %v132
    %863 = vmatmul.f32.gmra.mxu0 %v16
    %v864 = vpop.f32.mrf.mxu0
    %v865 = vadd.f32 %v773, %v864
    %866 = vmatmul.f32.gmra.mxu0 %v18
    %v867 = vpop.f32.mrf.mxu0
    %v868 = vadd.f32 %v776, %v867
    %869 = vmatmul.f32.gmra.mxu0 %v20
    %v870 = vpop.f32.mrf.mxu0
    %v871 = vadd.f32 %v779, %v870
    %872 = vmatmul.f32.gmra.mxu0 %v22
    %v873 = vpop.f32.mrf.mxu0
    %v874 = vadd.f32 %v782, %v873
    %875 = vmatmul.f32.gmra.mxu0 %v24
    %v876 = vpop.f32.mrf.mxu0
    %v877 = vadd.f32 %v785, %v876
    %878 = vmatmul.f32.gmra.mxu0 %v26
    %v879 = vpop.f32.mrf.mxu0
    %v880 = vadd.f32 %v788, %v879
    %881 = vmatmul.f32.gmra.mxu0 %v28
    %v882 = vpop.f32.mrf.mxu0
    %v883 = vadd.f32 %v791, %v882
    %884 = vmatmul.f32.gmra.mxu0 %v30
    %v885 = vpop.f32.mrf.mxu0
    %v886 = vadd.f32 %v794, %v885
    %887 = vmatmul.f32.gmra.mxu0 %v32
    %v888 = vpop.f32.mrf.mxu0
    %v889 = vadd.f32 %v797, %v888
    %890 = vmatmul.f32.gmra.mxu0 %v34
    %v891 = vpop.f32.mrf.mxu0
    %v892 = vadd.f32 %v800, %v891
    %893 = vmatmul.f32.gmra.mxu0 %v36
    %v894 = vpop.f32.mrf.mxu0
    %v895 = vadd.f32 %v803, %v894
    %896 = vmatmul.f32.gmra.mxu0 %v38
    %v897 = vpop.f32.mrf.mxu0
    %v898 = vadd.f32 %v806, %v897
    %899 = vmatmul.f32.gmra.mxu0 %v40
    %v900 = vpop.f32.mrf.mxu0
    %v901 = vadd.f32 %v809, %v900
    %902 = vmatmul.f32.gmra.mxu0 %v42
    %v903 = vpop.f32.mrf.mxu0
    %v904 = vadd.f32 %v812, %v903
    %905 = vmatmul.f32.gmra.mxu0 %v44
    %v906 = vpop.f32.mrf.mxu0
    %v907 = vadd.f32 %v815, %v906
    %908 = vmatmul.f32.gmra.mxu0 %v46
    %v909 = vpop.f32.mrf.mxu0
    %v910 = vadd.f32 %v818, %v909
    %911 = vmatmul.f32.gmra.mxu0 %v48
    %v912 = vpop.f32.mrf.mxu0
    %v913 = vadd.f32 %v821, %v912
    %914 = vmatmul.f32.gmra.mxu0 %v50
    %v915 = vpop.f32.mrf.mxu0
    %v916 = vadd.f32 %v824, %v915
    %917 = vmatmul.f32.gmra.mxu0 %v52
    %v918 = vpop.f32.mrf.mxu0
    %v919 = vadd.f32 %v827, %v918
    %920 = vmatmul.f32.gmra.mxu0 %v54
    %v921 = vpop.f32.mrf.mxu0
    %v922 = vadd.f32 %v830, %v921
    %923 = vmatmul.f32.gmra.mxu0 %v56
    %v924 = vpop.f32.mrf.mxu0
    %v925 = vadd.f32 %v833, %v924
    %926 = vmatmul.f32.gmra.mxu0 %v58
    %v927 = vpop.f32.mrf.mxu0
    %v928 = vadd.f32 %v836, %v927
    %929 = vmatmul.f32.gmra.mxu0 %v60
    %v930 = vpop.f32.mrf.mxu0
    %v931 = vadd.f32 %v839, %v930
    %932 = vmatmul.f32.gmra.mxu0 %v62
    %v933 = vpop.f32.mrf.mxu0
    %v934 = vadd.f32 %v842, %v933
    %935 = vmatmul.f32.gmra.mxu0 %v64
    %v936 = vpop.f32.mrf.mxu0
    %v937 = vadd.f32 %v845, %v936
    %938 = vdwg.mxu0
    %v939 = vmax.f32 %v313, 0.0
    %v940 = vmax.f32 %v497, 0.0
    %v941 = vmax.f32 %v316, 0.0
    %v942 = vmax.f32 %v500, 0.0
    %v943 = vmax.f32 %v319, 0.0
    %v944 = vmax.f32 %v503, 0.0
    %v945 = vmax.f32 %v322, 0.0
    %v946 = vmax.f32 %v506, 0.0
    %v947 = vmax.f32 %v325, 0.0
    %v948 = vmax.f32 %v509, 0.0
    %v949 = vmax.f32 %v328, 0.0
    %v950 = vmax.f32 %v512, 0.0
    %v951 = vmax.f32 %v331, 0.0
    %v952 = vmax.f32 %v515, 0.0
    %v953 = vmax.f32 %v334, 0.0
    %v954 = vmax.f32 %v518, 0.0
    %v955 = vmax.f32 %v337, 0.0
    %v956 = vmax.f32 %v521, 0.0
    %v957 = vmax.f32 %v340, 0.0
    %v958 = vmax.f32 %v524, 0.0
    %v959 = vmax.f32 %v343, 0.0
    %v960 = vmax.f32 %v527, 0.0
    %v961 = vmax.f32 %v346, 0.0
    %v962 = vmax.f32 %v530, 0.0
    %v963 = vmax.f32 %v349, 0.0
    %v964 = vmax.f32 %v533, 0.0
    %v965 = vmax.f32 %v352, 0.0
    %v966 = vmax.f32 %v536, 0.0
    %v967 = vmax.f32 %v355, 0.0
    %v968 = vmax.f32 %v539, 0.0
    %v969 = vmax.f32 %v358, 0.0
    %v970 = vmax.f32 %v542, 0.0
    %v971 = vmax.f32 %v361, 0.0
    %v972 = vmax.f32 %v545, 0.0
    %v973 = vmax.f32 %v364, 0.0
    %v974 = vmax.f32 %v548, 0.0
    %v975 = vmax.f32 %v367, 0.0
    %v976 = vmax.f32 %v551, 0.0
    %v977 = vmax.f32 %v370, 0.0
    %v978 = vmax.f32 %v554, 0.0
    %v979 = vmax.f32 %v373, 0.0
    %v980 = vmax.f32 %v557, 0.0
    %v981 = vmax.f32 %v376, 0.0
    %v982 = vmax.f32 %v560, 0.0
    %v983 = vmax.f32 %v379, 0.0
    %v984 = vmax.f32 %v563, 0.0
    %v985 = vmax.f32 %v382, 0.0
    %v986 = vmax.f32 %v566, 0.0
    %v987 = vmax.f32 %v385, 0.0
    %v988 = vmax.f32 %v569, 0.0
    %v989 = vxor.u32 %v681, 2147483648
    %v990 = vxor.u32 %v865, 2147483648
    %v991 = vxor.u32 %v684, 2147483648
    %v992 = vxor.u32 %v868, 2147483648
    %v993 = vxor.u32 %v687, 2147483648
    %v994 = vxor.u32 %v871, 2147483648
    %v995 = vxor.u32 %v690, 2147483648
    %v996 = vxor.u32 %v874, 2147483648
    %v997 = vxor.u32 %v693, 2147483648
    %v998 = vxor.u32 %v877, 2147483648
    %v999 = vxor.u32 %v696, 2147483648
    %v1000 = vxor.u32 %v880, 2147483648
    %v1001 = vxor.u32 %v699, 2147483648
    %v1002 = vxor.u32 %v883, 2147483648
    %v1003 = vxor.u32 %v702, 2147483648
    %v1004 = vxor.u32 %v886, 2147483648
    %v1005 = vxor.u32 %v705, 2147483648
    %v1006 = vxor.u32 %v889, 2147483648
    %v1007 = vxor.u32 %v708, 2147483648
    %v1008 = vxor.u32 %v892, 2147483648
    %v1009 = vxor.u32 %v711, 2147483648
    %v1010 = vxor.u32 %v895, 2147483648
    %v1011 = vxor.u32 %v714, 2147483648
    %v1012 = vxor.u32 %v898, 2147483648
    %v1013 = vxor.u32 %v717, 2147483648
    %v1014 = vxor.u32 %v901, 2147483648
    %v1015 = vxor.u32 %v720, 2147483648
    %v1016 = vxor.u32 %v904, 2147483648
    %v1017 = vxor.u32 %v723, 2147483648
    %v1018 = vxor.u32 %v907, 2147483648
    %v1019 = vxor.u32 %v726, 2147483648
    %v1020 = vxor.u32 %v910, 2147483648
    %v1021 = vxor.u32 %v729, 2147483648
    %v1022 = vxor.u32 %v913, 2147483648
    %v1023 = vxor.u32 %v732, 2147483648
    %v1024 = vxor.u32 %v916, 2147483648
    %v1025 = vxor.u32 %v735, 2147483648
    %v1026 = vxor.u32 %v919, 2147483648
    %v1027 = vxor.u32 %v738, 2147483648
    %v1028 = vxor.u32 %v922, 2147483648
    %v1029 = vxor.u32 %v741, 2147483648
    %v1030 = vxor.u32 %v925, 2147483648
    %v1031 = vxor.u32 %v744, 2147483648
    %v1032 = vxor.u32 %v928, 2147483648
    %v1033 = vxor.u32 %v747, 2147483648
    %v1034 = vxor.u32 %v931, 2147483648
    %v1035 = vxor.u32 %v750, 2147483648
    %v1036 = vxor.u32 %v934, 2147483648
    %v1037 = vxor.u32 %v753, 2147483648
    %v1038 = vxor.u32 %v937, 2147483648
    %v1039 = vmul.f32 %v989, 1.442695
    %v1040 = vpow.pop %v1039
    %v1041 = vmul.f32 %v990, 1.442695
    %v1042 = vpow.pop %v1041
    %v1043 = vmul.f32 %v991, 1.442695
    %v1044 = vpow.pop %v1043
    %v1045 = vmul.f32 %v992, 1.442695
    %v1046 = vpow.pop %v1045
    %v1047 = vmul.f32 %v993, 1.442695
    %v1048 = vpow.pop %v1047
    %v1049 = vmul.f32 %v994, 1.442695
    %v1050 = vpow.pop %v1049
    %v1051 = vmul.f32 %v995, 1.442695
    %v1052 = vpow.pop %v1051
    %v1053 = vmul.f32 %v996, 1.442695
    %v1054 = vpow.pop %v1053
    %v1055 = vmul.f32 %v997, 1.442695
    %v1056 = vpow.pop %v1055
    %v1057 = vmul.f32 %v998, 1.442695
    %v1058 = vpow.pop %v1057
    %v1059 = vmul.f32 %v999, 1.442695
    %v1060 = vpow.pop %v1059
    %v1061 = vmul.f32 %v1000, 1.442695
    %v1062 = vpow.pop %v1061
    %v1063 = vmul.f32 %v1001, 1.442695
    %v1064 = vpow.pop %v1063
    %v1065 = vmul.f32 %v1002, 1.442695
    %v1066 = vpow.pop %v1065
    %v1067 = vmul.f32 %v1003, 1.442695
    %v1068 = vpow.pop %v1067
    %v1069 = vmul.f32 %v1004, 1.442695
    %v1070 = vpow.pop %v1069
    %v1071 = vmul.f32 %v1005, 1.442695
    %v1072 = vpow.pop %v1071
    %v1073 = vmul.f32 %v1006, 1.442695
    %v1074 = vpow.pop %v1073
    %v1075 = vmul.f32 %v1007, 1.442695
    %v1076 = vpow.pop %v1075
    %v1077 = vmul.f32 %v1008, 1.442695
    %v1078 = vpow.pop %v1077
    %v1079 = vmul.f32 %v1009, 1.442695
    %v1080 = vpow.pop %v1079
    %v1081 = vmul.f32 %v1010, 1.442695
    %v1082 = vpow.pop %v1081
    %v1083 = vmul.f32 %v1011, 1.442695
    %v1084 = vpow.pop %v1083
    %v1085 = vmul.f32 %v1012, 1.442695
    %v1086 = vpow.pop %v1085
    %v1087 = vmul.f32 %v1013, 1.442695
    %v1088 = vpow.pop %v1087
    %v1089 = vmul.f32 %v1014, 1.442695
    %v1090 = vpow.pop %v1089
    %v1091 = vmul.f32 %v1015, 1.442695
    %v1092 = vpow.pop %v1091
    %v1093 = vmul.f32 %v1016, 1.442695
    %v1094 = vpow.pop %v1093
    %v1095 = vmul.f32 %v1017, 1.442695
    %v1096 = vpow.pop %v1095
    %v1097 = vmul.f32 %v1018, 1.442695
    %v1098 = vpow.pop %v1097
    %v1099 = vmul.f32 %v1019, 1.442695
    %v1100 = vpow.pop %v1099
    %v1101 = vmul.f32 %v1020, 1.442695
    %v1102 = vpow.pop %v1101
    %v1103 = vmul.f32 %v1021, 1.442695
    %v1104 = vpow.pop %v1103
    %v1105 = vmul.f32 %v1022, 1.442695
    %v1106 = vpow.pop %v1105
    %v1107 = vmul.f32 %v1023, 1.442695
    %v1108 = vpow.pop %v1107
    %v1109 = vmul.f32 %v1024, 1.442695
    %v1110 = vpow.pop %v1109
    %v1111 = vmul.f32 %v1025, 1.442695
    %v1112 = vpow.pop %v1111
    %v1113 = vmul.f32 %v1026, 1.442695
    %v1114 = vpow.pop %v1113
    %v1115 = vmul.f32 %v1027, 1.442695
    %v1116 = vpow.pop %v1115
    %v1117 = vmul.f32 %v1028, 1.442695
    %v1118 = vpow.pop %v1117
    %v1119 = vmul.f32 %v1029, 1.442695
    %v1120 = vpow.pop %v1119
    %v1121 = vmul.f32 %v1030, 1.442695
    %v1122 = vpow.pop %v1121
    %v1123 = vmul.f32 %v1031, 1.442695
    %v1124 = vpow.pop %v1123
    %v1125 = vmul.f32 %v1032, 1.442695
    %v1126 = vpow.pop %v1125
    %v1127 = vmul.f32 %v1033, 1.442695
    %v1128 = vpow.pop %v1127
    %v1129 = vmul.f32 %v1034, 1.442695
    %v1130 = vpow.pop %v1129
    %v1131 = vmul.f32 %v1035, 1.442695
    %v1132 = vpow.pop %v1131
    %v1133 = vmul.f32 %v1036, 1.442695
    %v1134 = vpow.pop %v1133
    %v1135 = vmul.f32 %v1037, 1.442695
    %v1136 = vpow.pop %v1135
    %v1137 = vmul.f32 %v1038, 1.442695
    %v1138 = vpow.pop %v1137
    %v1139 = vadd.f32 %v1040, 1.0
    %v1140 = vadd.f32 %v1042, 1.0
    %v1141 = vadd.f32 %v1044, 1.0
    %v1142 = vadd.f32 %v1046, 1.0
    %v1143 = vadd.f32 %v1048, 1.0
    %v1144 = vadd.f32 %v1050, 1.0
    %v1145 = vadd.f32 %v1052, 1.0
    %v1146 = vadd.f32 %v1054, 1.0
    %v1147 = vadd.f32 %v1056, 1.0
    %v1148 = vadd.f32 %v1058, 1.0
    %v1149 = vadd.f32 %v1060, 1.0
    %v1150 = vadd.f32 %v1062, 1.0
    %v1151 = vadd.f32 %v1064, 1.0
    %v1152 = vadd.f32 %v1066, 1.0
    %v1153 = vadd.f32 %v1068, 1.0
    %v1154 = vadd.f32 %v1070, 1.0
    %v1155 = vadd.f32 %v1072, 1.0
    %v1156 = vadd.f32 %v1074, 1.0
    %v1157 = vadd.f32 %v1076, 1.0
    %v1158 = vadd.f32 %v1078, 1.0
    %v1159 = vadd.f32 %v1080, 1.0
    %v1160 = vadd.f32 %v1082, 1.0
    %v1161 = vadd.f32 %v1084, 1.0
    %v1162 = vadd.f32 %v1086, 1.0
    %v1163 = vadd.f32 %v1088, 1.0
    %v1164 = vadd.f32 %v1090, 1.0
    %v1165 = vadd.f32 %v1092, 1.0
    %v1166 = vadd.f32 %v1094, 1.0
    %v1167 = vadd.f32 %v1096, 1.0
    %v1168 = vadd.f32 %v1098, 1.0
    %v1169 = vadd.f32 %v1100, 1.0
    %v1170 = vadd.f32 %v1102, 1.0
    %v1171 = vadd.f32 %v1104, 1.0
    %v1172 = vadd.f32 %v1106, 1.0
    %v1173 = vadd.f32 %v1108, 1.0
    %v1174 = vadd.f32 %v1110, 1.0
    %v1175 = vadd.f32 %v1112, 1.0
    %v1176 = vadd.f32 %v1114, 1.0
    %v1177 = vadd.f32 %v1116, 1.0
    %v1178 = vadd.f32 %v1118, 1.0
    %v1179 = vadd.f32 %v1120, 1.0
    %v1180 = vadd.f32 %v1122, 1.0
    %v1181 = vadd.f32 %v1124, 1.0
    %v1182 = vadd.f32 %v1126, 1.0
    %v1183 = vadd.f32 %v1128, 1.0
    %v1184 = vadd.f32 %v1130, 1.0
    %v1185 = vadd.f32 %v1132, 1.0
    %v1186 = vadd.f32 %v1134, 1.0
    %v1187 = vadd.f32 %v1136, 1.0
    %v1188 = vadd.f32 %v1138, 1.0
    %v1189 = vrcp.pop %v1139
    %v1190 = vmul.f32 %v1139, %v1189
    %v1191 = vsub.f32 1.0, %v1190
    %v1192 = vmul.f32 %v1189, %v1191
    %v1193 = vadd.f32 %v1189, %v1192
    %vm1194 = vweird.f32 %v1139
    %vm1195 = vweird.f32 %v1189
    %vm1196 = vmor %vm1194, %vm1195
    %v1197 = vsel %vm1196, %v1189, %v1193
    %v1198 = vand.u32 2147483647, %v1139
    %vm1199 = vcmp.eq.f32.partialorder %v1198, 8.507059e+37
    %v1200 = vand.u32 %v1139, 2147483648
    %v1201 = vor.u32 1.1754944e-38, %v1200
    %v1202 = vsel %vm1199, %v1201, %v1197
    %v1203 = vmul.f32 1.0, %v1202
    %v1204 = vrcp.pop %v1140
    %v1205 = vmul.f32 %v1140, %v1204
    %v1206 = vsub.f32 1.0, %v1205
    %v1207 = vmul.f32 %v1204, %v1206
    %v1208 = vadd.f32 %v1204, %v1207
    %vm1209 = vweird.f32 %v1140
    %vm1210 = vweird.f32 %v1204
    %vm1211 = vmor %vm1209, %vm1210
    %v1212 = vsel %vm1211, %v1204, %v1208
    %v1213 = vand.u32 2147483647, %v1140
    %vm1214 = vcmp.eq.f32.partialorder %v1213, 8.507059e+37
    %v1215 = vand.u32 %v1140, 2147483648
    %v1216 = vor.u32 1.1754944e-38, %v1215
    %v1217 = vsel %vm1214, %v1216, %v1212
    %v1218 = vmul.f32 1.0, %v1217
    %v1219 = vrcp.pop %v1141
    %v1220 = vmul.f32 %v1141, %v1219
    %v1221 = vsub.f32 1.0, %v1220
    %v1222 = vmul.f32 %v1219, %v1221
    %v1223 = vadd.f32 %v1219, %v1222
    %vm1224 = vweird.f32 %v1141
    %vm1225 = vweird.f32 %v1219
    %vm1226 = vmor %vm1224, %vm1225
    %v1227 = vsel %vm1226, %v1219, %v1223
    %v1228 = vand.u32 2147483647, %v1141
    %vm1229 = vcmp.eq.f32.partialorder %v1228, 8.507059e+37
    %v1230 = vand.u32 %v1141, 2147483648
    %v1231 = vor.u32 1.1754944e-38, %v1230
    %v1232 = vsel %vm1229, %v1231, %v1227
    %v1233 = vmul.f32 1.0, %v1232
    %v1234 = vrcp.pop %v1142
    %v1235 = vmul.f32 %v1142, %v1234
    %v1236 = vsub.f32 1.0, %v1235
    %v1237 = vmul.f32 %v1234, %v1236
    %v1238 = vadd.f32 %v1234, %v1237
    %vm1239 = vweird.f32 %v1142
    %vm1240 = vweird.f32 %v1234
    %vm1241 = vmor %vm1239, %vm1240
    %v1242 = vsel %vm1241, %v1234, %v1238
    %v1243 = vand.u32 2147483647, %v1142
    %vm1244 = vcmp.eq.f32.partialorder %v1243, 8.507059e+37
    %v1245 = vand.u32 %v1142, 2147483648
    %v1246 = vor.u32 1.1754944e-38, %v1245
    %v1247 = vsel %vm1244, %v1246, %v1242
    %v1248 = vmul.f32 1.0, %v1247
    %v1249 = vrcp.pop %v1143
    %v1250 = vmul.f32 %v1143, %v1249
    %v1251 = vsub.f32 1.0, %v1250
    %v1252 = vmul.f32 %v1249, %v1251
    %v1253 = vadd.f32 %v1249, %v1252
    %vm1254 = vweird.f32 %v1143
    %vm1255 = vweird.f32 %v1249
    %vm1256 = vmor %vm1254, %vm1255
    %v1257 = vsel %vm1256, %v1249, %v1253
    %v1258 = vand.u32 2147483647, %v1143
    %vm1259 = vcmp.eq.f32.partialorder %v1258, 8.507059e+37
    %v1260 = vand.u32 %v1143, 2147483648
    %v1261 = vor.u32 1.1754944e-38, %v1260
    %v1262 = vsel %vm1259, %v1261, %v1257
    %v1263 = vmul.f32 1.0, %v1262
    %v1264 = vrcp.pop %v1144
    %v1265 = vmul.f32 %v1144, %v1264
    %v1266 = vsub.f32 1.0, %v1265
    %v1267 = vmul.f32 %v1264, %v1266
    %v1268 = vadd.f32 %v1264, %v1267
    %vm1269 = vweird.f32 %v1144
    %vm1270 = vweird.f32 %v1264
    %vm1271 = vmor %vm1269, %vm1270
    %v1272 = vsel %vm1271, %v1264, %v1268
    %v1273 = vand.u32 2147483647, %v1144
    %vm1274 = vcmp.eq.f32.partialorder %v1273, 8.507059e+37
    %v1275 = vand.u32 %v1144, 2147483648
    %v1276 = vor.u32 1.1754944e-38, %v1275
    %v1277 = vsel %vm1274, %v1276, %v1272
    %v1278 = vmul.f32 1.0, %v1277
    %v1279 = vrcp.pop %v1145
    %v1280 = vmul.f32 %v1145, %v1279
    %v1281 = vsub.f32 1.0, %v1280
    %v1282 = vmul.f32 %v1279, %v1281
    %v1283 = vadd.f32 %v1279, %v1282
    %vm1284 = vweird.f32 %v1145
    %vm1285 = vweird.f32 %v1279
    %vm1286 = vmor %vm1284, %vm1285
    %v1287 = vsel %vm1286, %v1279, %v1283
    %v1288 = vand.u32 2147483647, %v1145
    %vm1289 = vcmp.eq.f32.partialorder %v1288, 8.507059e+37
    %v1290 = vand.u32 %v1145, 2147483648
    %v1291 = vor.u32 1.1754944e-38, %v1290
    %v1292 = vsel %vm1289, %v1291, %v1287
    %v1293 = vmul.f32 1.0, %v1292
    %v1294 = vrcp.pop %v1146
    %v1295 = vmul.f32 %v1146, %v1294
    %v1296 = vsub.f32 1.0, %v1295
    %v1297 = vmul.f32 %v1294, %v1296
    %v1298 = vadd.f32 %v1294, %v1297
    %vm1299 = vweird.f32 %v1146
    %vm1300 = vweird.f32 %v1294
    %vm1301 = vmor %vm1299, %vm1300
    %v1302 = vsel %vm1301, %v1294, %v1298
    %v1303 = vand.u32 2147483647, %v1146
    %vm1304 = vcmp.eq.f32.partialorder %v1303, 8.507059e+37
    %v1305 = vand.u32 %v1146, 2147483648
    %v1306 = vor.u32 1.1754944e-38, %v1305
    %v1307 = vsel %vm1304, %v1306, %v1302
    %v1308 = vmul.f32 1.0, %v1307
    %v1309 = vrcp.pop %v1147
    %v1310 = vmul.f32 %v1147, %v1309
    %v1311 = vsub.f32 1.0, %v1310
    %v1312 = vmul.f32 %v1309, %v1311
    %v1313 = vadd.f32 %v1309, %v1312
    %vm1314 = vweird.f32 %v1147
    %vm1315 = vweird.f32 %v1309
    %vm1316 = vmor %vm1314, %vm1315
    %v1317 = vsel %vm1316, %v1309, %v1313
    %v1318 = vand.u32 2147483647, %v1147
    %vm1319 = vcmp.eq.f32.partialorder %v1318, 8.507059e+37
    %v1320 = vand.u32 %v1147, 2147483648
    %v1321 = vor.u32 1.1754944e-38, %v1320
    %v1322 = vsel %vm1319, %v1321, %v1317
    %v1323 = vmul.f32 1.0, %v1322
    %v1324 = vrcp.pop %v1148
    %v1325 = vmul.f32 %v1148, %v1324
    %v1326 = vsub.f32 1.0, %v1325
    %v1327 = vmul.f32 %v1324, %v1326
    %v1328 = vadd.f32 %v1324, %v1327
    %vm1329 = vweird.f32 %v1148
    %vm1330 = vweird.f32 %v1324
    %vm1331 = vmor %vm1329, %vm1330
    %v1332 = vsel %vm1331, %v1324, %v1328
    %v1333 = vand.u32 2147483647, %v1148
    %vm1334 = vcmp.eq.f32.partialorder %v1333, 8.507059e+37
    %v1335 = vand.u32 %v1148, 2147483648
    %v1336 = vor.u32 1.1754944e-38, %v1335
    %v1337 = vsel %vm1334, %v1336, %v1332
    %v1338 = vmul.f32 1.0, %v1337
    %v1339 = vrcp.pop %v1149
    %v1340 = vmul.f32 %v1149, %v1339
    %v1341 = vsub.f32 1.0, %v1340
    %v1342 = vmul.f32 %v1339, %v1341
    %v1343 = vadd.f32 %v1339, %v1342
    %vm1344 = vweird.f32 %v1149
    %vm1345 = vweird.f32 %v1339
    %vm1346 = vmor %vm1344, %vm1345
    %v1347 = vsel %vm1346, %v1339, %v1343
    %v1348 = vand.u32 2147483647, %v1149
    %vm1349 = vcmp.eq.f32.partialorder %v1348, 8.507059e+37
    %v1350 = vand.u32 %v1149, 2147483648
    %v1351 = vor.u32 1.1754944e-38, %v1350
    %v1352 = vsel %vm1349, %v1351, %v1347
    %v1353 = vmul.f32 1.0, %v1352
    %v1354 = vrcp.pop %v1150
    %v1355 = vmul.f32 %v1150, %v1354
    %v1356 = vsub.f32 1.0, %v1355
    %v1357 = vmul.f32 %v1354, %v1356
    %v1358 = vadd.f32 %v1354, %v1357
    %vm1359 = vweird.f32 %v1150
    %vm1360 = vweird.f32 %v1354
    %vm1361 = vmor %vm1359, %vm1360
    %v1362 = vsel %vm1361, %v1354, %v1358
    %v1363 = vand.u32 2147483647, %v1150
    %vm1364 = vcmp.eq.f32.partialorder %v1363, 8.507059e+37
    %v1365 = vand.u32 %v1150, 2147483648
    %v1366 = vor.u32 1.1754944e-38, %v1365
    %v1367 = vsel %vm1364, %v1366, %v1362
    %v1368 = vmul.f32 1.0, %v1367
    %v1369 = vrcp.pop %v1151
    %v1370 = vmul.f32 %v1151, %v1369
    %v1371 = vsub.f32 1.0, %v1370
    %v1372 = vmul.f32 %v1369, %v1371
    %v1373 = vadd.f32 %v1369, %v1372
    %vm1374 = vweird.f32 %v1151
    %vm1375 = vweird.f32 %v1369
    %vm1376 = vmor %vm1374, %vm1375
    %v1377 = vsel %vm1376, %v1369, %v1373
    %v1378 = vand.u32 2147483647, %v1151
    %vm1379 = vcmp.eq.f32.partialorder %v1378, 8.507059e+37
    %v1380 = vand.u32 %v1151, 2147483648
    %v1381 = vor.u32 1.1754944e-38, %v1380
    %v1382 = vsel %vm1379, %v1381, %v1377
    %v1383 = vmul.f32 1.0, %v1382
    %v1384 = vrcp.pop %v1152
    %v1385 = vmul.f32 %v1152, %v1384
    %v1386 = vsub.f32 1.0, %v1385
    %v1387 = vmul.f32 %v1384, %v1386
    %v1388 = vadd.f32 %v1384, %v1387
    %vm1389 = vweird.f32 %v1152
    %vm1390 = vweird.f32 %v1384
    %vm1391 = vmor %vm1389, %vm1390
    %v1392 = vsel %vm1391, %v1384, %v1388
    %v1393 = vand.u32 2147483647, %v1152
    %vm1394 = vcmp.eq.f32.partialorder %v1393, 8.507059e+37
    %v1395 = vand.u32 %v1152, 2147483648
    %v1396 = vor.u32 1.1754944e-38, %v1395
    %v1397 = vsel %vm1394, %v1396, %v1392
    %v1398 = vmul.f32 1.0, %v1397
    %v1399 = vrcp.pop %v1153
    %v1400 = vmul.f32 %v1153, %v1399
    %v1401 = vsub.f32 1.0, %v1400
    %v1402 = vmul.f32 %v1399, %v1401
    %v1403 = vadd.f32 %v1399, %v1402
    %vm1404 = vweird.f32 %v1153
    %vm1405 = vweird.f32 %v1399
    %vm1406 = vmor %vm1404, %vm1405
    %v1407 = vsel %vm1406, %v1399, %v1403
    %v1408 = vand.u32 2147483647, %v1153
    %vm1409 = vcmp.eq.f32.partialorder %v1408, 8.507059e+37
    %v1410 = vand.u32 %v1153, 2147483648
    %v1411 = vor.u32 1.1754944e-38, %v1410
    %v1412 = vsel %vm1409, %v1411, %v1407
    %v1413 = vmul.f32 1.0, %v1412
    %v1414 = vrcp.pop %v1154
    %v1415 = vmul.f32 %v1154, %v1414
    %v1416 = vsub.f32 1.0, %v1415
    %v1417 = vmul.f32 %v1414, %v1416
    %v1418 = vadd.f32 %v1414, %v1417
    %vm1419 = vweird.f32 %v1154
    %vm1420 = vweird.f32 %v1414
    %vm1421 = vmor %vm1419, %vm1420
    %v1422 = vsel %vm1421, %v1414, %v1418
    %v1423 = vand.u32 2147483647, %v1154
    %vm1424 = vcmp.eq.f32.partialorder %v1423, 8.507059e+37
    %v1425 = vand.u32 %v1154, 2147483648
    %v1426 = vor.u32 1.1754944e-38, %v1425
    %v1427 = vsel %vm1424, %v1426, %v1422
    %v1428 = vmul.f32 1.0, %v1427
    %v1429 = vrcp.pop %v1155
    %v1430 = vmul.f32 %v1155, %v1429
    %v1431 = vsub.f32 1.0, %v1430
    %v1432 = vmul.f32 %v1429, %v1431
    %v1433 = vadd.f32 %v1429, %v1432
    %vm1434 = vweird.f32 %v1155
    %vm1435 = vweird.f32 %v1429
    %vm1436 = vmor %vm1434, %vm1435
    %v1437 = vsel %vm1436, %v1429, %v1433
    %v1438 = vand.u32 2147483647, %v1155
    %vm1439 = vcmp.eq.f32.partialorder %v1438, 8.507059e+37
    %v1440 = vand.u32 %v1155, 2147483648
    %v1441 = vor.u32 1.1754944e-38, %v1440
    %v1442 = vsel %vm1439, %v1441, %v1437
    %v1443 = vmul.f32 1.0, %v1442
    %v1444 = vrcp.pop %v1156
    %v1445 = vmul.f32 %v1156, %v1444
    %v1446 = vsub.f32 1.0, %v1445
    %v1447 = vmul.f32 %v1444, %v1446
    %v1448 = vadd.f32 %v1444, %v1447
    %vm1449 = vweird.f32 %v1156
    %vm1450 = vweird.f32 %v1444
    %vm1451 = vmor %vm1449, %vm1450
    %v1452 = vsel %vm1451, %v1444, %v1448
    %v1453 = vand.u32 2147483647, %v1156
    %vm1454 = vcmp.eq.f32.partialorder %v1453, 8.507059e+37
    %v1455 = vand.u32 %v1156, 2147483648
    %v1456 = vor.u32 1.1754944e-38, %v1455
    %v1457 = vsel %vm1454, %v1456, %v1452
    %v1458 = vmul.f32 1.0, %v1457
    %v1459 = vrcp.pop %v1157
    %v1460 = vmul.f32 %v1157, %v1459
    %v1461 = vsub.f32 1.0, %v1460
    %v1462 = vmul.f32 %v1459, %v1461
    %v1463 = vadd.f32 %v1459, %v1462
    %vm1464 = vweird.f32 %v1157
    %vm1465 = vweird.f32 %v1459
    %vm1466 = vmor %vm1464, %vm1465
    %v1467 = vsel %vm1466, %v1459, %v1463
    %v1468 = vand.u32 2147483647, %v1157
    %vm1469 = vcmp.eq.f32.partialorder %v1468, 8.507059e+37
    %v1470 = vand.u32 %v1157, 2147483648
    %v1471 = vor.u32 1.1754944e-38, %v1470
    %v1472 = vsel %vm1469, %v1471, %v1467
    %v1473 = vmul.f32 1.0, %v1472
    %v1474 = vrcp.pop %v1158
    %v1475 = vmul.f32 %v1158, %v1474
    %v1476 = vsub.f32 1.0, %v1475
    %v1477 = vmul.f32 %v1474, %v1476
    %v1478 = vadd.f32 %v1474, %v1477
    %vm1479 = vweird.f32 %v1158
    %vm1480 = vweird.f32 %v1474
    %vm1481 = vmor %vm1479, %vm1480
    %v1482 = vsel %vm1481, %v1474, %v1478
    %v1483 = vand.u32 2147483647, %v1158
    %vm1484 = vcmp.eq.f32.partialorder %v1483, 8.507059e+37
    %v1485 = vand.u32 %v1158, 2147483648
    %v1486 = vor.u32 1.1754944e-38, %v1485
    %v1487 = vsel %vm1484, %v1486, %v1482
    %v1488 = vmul.f32 1.0, %v1487
    %v1489 = vrcp.pop %v1159
    %v1490 = vmul.f32 %v1159, %v1489
    %v1491 = vsub.f32 1.0, %v1490
    %v1492 = vmul.f32 %v1489, %v1491
    %v1493 = vadd.f32 %v1489, %v1492
    %vm1494 = vweird.f32 %v1159
    %vm1495 = vweird.f32 %v1489
    %vm1496 = vmor %vm1494, %vm1495
    %v1497 = vsel %vm1496, %v1489, %v1493
    %v1498 = vand.u32 2147483647, %v1159
    %vm1499 = vcmp.eq.f32.partialorder %v1498, 8.507059e+37
    %v1500 = vand.u32 %v1159, 2147483648
    %v1501 = vor.u32 1.1754944e-38, %v1500
    %v1502 = vsel %vm1499, %v1501, %v1497
    %v1503 = vmul.f32 1.0, %v1502
    %v1504 = vrcp.pop %v1160
    %v1505 = vmul.f32 %v1160, %v1504
    %v1506 = vsub.f32 1.0, %v1505
    %v1507 = vmul.f32 %v1504, %v1506
    %v1508 = vadd.f32 %v1504, %v1507
    %vm1509 = vweird.f32 %v1160
    %vm1510 = vweird.f32 %v1504
    %vm1511 = vmor %vm1509, %vm1510
    %v1512 = vsel %vm1511, %v1504, %v1508
    %v1513 = vand.u32 2147483647, %v1160
    %vm1514 = vcmp.eq.f32.partialorder %v1513, 8.507059e+37
    %v1515 = vand.u32 %v1160, 2147483648
    %v1516 = vor.u32 1.1754944e-38, %v1515
    %v1517 = vsel %vm1514, %v1516, %v1512
    %v1518 = vmul.f32 1.0, %v1517
    %v1519 = vrcp.pop %v1161
    %v1520 = vmul.f32 %v1161, %v1519
    %v1521 = vsub.f32 1.0, %v1520
    %v1522 = vmul.f32 %v1519, %v1521
    %v1523 = vadd.f32 %v1519, %v1522
    %vm1524 = vweird.f32 %v1161
    %vm1525 = vweird.f32 %v1519
    %vm1526 = vmor %vm1524, %vm1525
    %v1527 = vsel %vm1526, %v1519, %v1523
    %v1528 = vand.u32 2147483647, %v1161
    %vm1529 = vcmp.eq.f32.partialorder %v1528, 8.507059e+37
    %v1530 = vand.u32 %v1161, 2147483648
    %v1531 = vor.u32 1.1754944e-38, %v1530
    %v1532 = vsel %vm1529, %v1531, %v1527
    %v1533 = vmul.f32 1.0, %v1532
    %v1534 = vrcp.pop %v1162
    %v1535 = vmul.f32 %v1162, %v1534
    %v1536 = vsub.f32 1.0, %v1535
    %v1537 = vmul.f32 %v1534, %v1536
    %v1538 = vadd.f32 %v1534, %v1537
    %vm1539 = vweird.f32 %v1162
    %vm1540 = vweird.f32 %v1534
    %vm1541 = vmor %vm1539, %vm1540
    %v1542 = vsel %vm1541, %v1534, %v1538
    %v1543 = vand.u32 2147483647, %v1162
    %vm1544 = vcmp.eq.f32.partialorder %v1543, 8.507059e+37
    %v1545 = vand.u32 %v1162, 2147483648
    %v1546 = vor.u32 1.1754944e-38, %v1545
    %v1547 = vsel %vm1544, %v1546, %v1542
    %v1548 = vmul.f32 1.0, %v1547
    %v1549 = vrcp.pop %v1163
    %v1550 = vmul.f32 %v1163, %v1549
    %v1551 = vsub.f32 1.0, %v1550
    %v1552 = vmul.f32 %v1549, %v1551
    %v1553 = vadd.f32 %v1549, %v1552
    %vm1554 = vweird.f32 %v1163
    %vm1555 = vweird.f32 %v1549
    %vm1556 = vmor %vm1554, %vm1555
    %v1557 = vsel %vm1556, %v1549, %v1553
    %v1558 = vand.u32 2147483647, %v1163
    %vm1559 = vcmp.eq.f32.partialorder %v1558, 8.507059e+37
    %v1560 = vand.u32 %v1163, 2147483648
    %v1561 = vor.u32 1.1754944e-38, %v1560
    %v1562 = vsel %vm1559, %v1561, %v1557
    %v1563 = vmul.f32 1.0, %v1562
    %v1564 = vrcp.pop %v1164
    %v1565 = vmul.f32 %v1164, %v1564
    %v1566 = vsub.f32 1.0, %v1565
    %v1567 = vmul.f32 %v1564, %v1566
    %v1568 = vadd.f32 %v1564, %v1567
    %vm1569 = vweird.f32 %v1164
    %vm1570 = vweird.f32 %v1564
    %vm1571 = vmor %vm1569, %vm1570
    %v1572 = vsel %vm1571, %v1564, %v1568
    %v1573 = vand.u32 2147483647, %v1164
    %vm1574 = vcmp.eq.f32.partialorder %v1573, 8.507059e+37
    %v1575 = vand.u32 %v1164, 2147483648
    %v1576 = vor.u32 1.1754944e-38, %v1575
    %v1577 = vsel %vm1574, %v1576, %v1572
    %v1578 = vmul.f32 1.0, %v1577
    %v1579 = vrcp.pop %v1165
    %v1580 = vmul.f32 %v1165, %v1579
    %v1581 = vsub.f32 1.0, %v1580
    %v1582 = vmul.f32 %v1579, %v1581
    %v1583 = vadd.f32 %v1579, %v1582
    %vm1584 = vweird.f32 %v1165
    %vm1585 = vweird.f32 %v1579
    %vm1586 = vmor %vm1584, %vm1585
    %v1587 = vsel %vm1586, %v1579, %v1583
    %v1588 = vand.u32 2147483647, %v1165
    %vm1589 = vcmp.eq.f32.partialorder %v1588, 8.507059e+37
    %v1590 = vand.u32 %v1165, 2147483648
    %v1591 = vor.u32 1.1754944e-38, %v1590
    %v1592 = vsel %vm1589, %v1591, %v1587
    %v1593 = vmul.f32 1.0, %v1592
    %v1594 = vrcp.pop %v1166
    %v1595 = vmul.f32 %v1166, %v1594
    %v1596 = vsub.f32 1.0, %v1595
    %v1597 = vmul.f32 %v1594, %v1596
    %v1598 = vadd.f32 %v1594, %v1597
    %vm1599 = vweird.f32 %v1166
    %vm1600 = vweird.f32 %v1594
    %vm1601 = vmor %vm1599, %vm1600
    %v1602 = vsel %vm1601, %v1594, %v1598
    %v1603 = vand.u32 2147483647, %v1166
    %vm1604 = vcmp.eq.f32.partialorder %v1603, 8.507059e+37
    %v1605 = vand.u32 %v1166, 2147483648
    %v1606 = vor.u32 1.1754944e-38, %v1605
    %v1607 = vsel %vm1604, %v1606, %v1602
    %v1608 = vmul.f32 1.0, %v1607
    %v1609 = vrcp.pop %v1167
    %v1610 = vmul.f32 %v1167, %v1609
    %v1611 = vsub.f32 1.0, %v1610
    %v1612 = vmul.f32 %v1609, %v1611
    %v1613 = vadd.f32 %v1609, %v1612
    %vm1614 = vweird.f32 %v1167
    %vm1615 = vweird.f32 %v1609
    %vm1616 = vmor %vm1614, %vm1615
    %v1617 = vsel %vm1616, %v1609, %v1613
    %v1618 = vand.u32 2147483647, %v1167
    %vm1619 = vcmp.eq.f32.partialorder %v1618, 8.507059e+37
    %v1620 = vand.u32 %v1167, 2147483648
    %v1621 = vor.u32 1.1754944e-38, %v1620
    %v1622 = vsel %vm1619, %v1621, %v1617
    %v1623 = vmul.f32 1.0, %v1622
    %v1624 = vrcp.pop %v1168
    %v1625 = vmul.f32 %v1168, %v1624
    %v1626 = vsub.f32 1.0, %v1625
    %v1627 = vmul.f32 %v1624, %v1626
    %v1628 = vadd.f32 %v1624, %v1627
    %vm1629 = vweird.f32 %v1168
    %vm1630 = vweird.f32 %v1624
    %vm1631 = vmor %vm1629, %vm1630
    %v1632 = vsel %vm1631, %v1624, %v1628
    %v1633 = vand.u32 2147483647, %v1168
    %vm1634 = vcmp.eq.f32.partialorder %v1633, 8.507059e+37
    %v1635 = vand.u32 %v1168, 2147483648
    %v1636 = vor.u32 1.1754944e-38, %v1635
    %v1637 = vsel %vm1634, %v1636, %v1632
    %v1638 = vmul.f32 1.0, %v1637
    %v1639 = vrcp.pop %v1169
    %v1640 = vmul.f32 %v1169, %v1639
    %v1641 = vsub.f32 1.0, %v1640
    %v1642 = vmul.f32 %v1639, %v1641
    %v1643 = vadd.f32 %v1639, %v1642
    %vm1644 = vweird.f32 %v1169
    %vm1645 = vweird.f32 %v1639
    %vm1646 = vmor %vm1644, %vm1645
    %v1647 = vsel %vm1646, %v1639, %v1643
    %v1648 = vand.u32 2147483647, %v1169
    %vm1649 = vcmp.eq.f32.partialorder %v1648, 8.507059e+37
    %v1650 = vand.u32 %v1169, 2147483648
    %v1651 = vor.u32 1.1754944e-38, %v1650
    %v1652 = vsel %vm1649, %v1651, %v1647
    %v1653 = vmul.f32 1.0, %v1652
    %v1654 = vrcp.pop %v1170
    %v1655 = vmul.f32 %v1170, %v1654
    %v1656 = vsub.f32 1.0, %v1655
    %v1657 = vmul.f32 %v1654, %v1656
    %v1658 = vadd.f32 %v1654, %v1657
    %vm1659 = vweird.f32 %v1170
    %vm1660 = vweird.f32 %v1654
    %vm1661 = vmor %vm1659, %vm1660
    %v1662 = vsel %vm1661, %v1654, %v1658
    %v1663 = vand.u32 2147483647, %v1170
    %vm1664 = vcmp.eq.f32.partialorder %v1663, 8.507059e+37
    %v1665 = vand.u32 %v1170, 2147483648
    %v1666 = vor.u32 1.1754944e-38, %v1665
    %v1667 = vsel %vm1664, %v1666, %v1662
    %v1668 = vmul.f32 1.0, %v1667
    %v1669 = vrcp.pop %v1171
    %v1670 = vmul.f32 %v1171, %v1669
    %v1671 = vsub.f32 1.0, %v1670
    %v1672 = vmul.f32 %v1669, %v1671
    %v1673 = vadd.f32 %v1669, %v1672
    %vm1674 = vweird.f32 %v1171
    %vm1675 = vweird.f32 %v1669
    %vm1676 = vmor %vm1674, %vm1675
    %v1677 = vsel %vm1676, %v1669, %v1673
    %v1678 = vand.u32 2147483647, %v1171
    %vm1679 = vcmp.eq.f32.partialorder %v1678, 8.507059e+37
    %v1680 = vand.u32 %v1171, 2147483648
    %v1681 = vor.u32 1.1754944e-38, %v1680
    %v1682 = vsel %vm1679, %v1681, %v1677
    %v1683 = vmul.f32 1.0, %v1682
    %v1684 = vrcp.pop %v1172
    %v1685 = vmul.f32 %v1172, %v1684
    %v1686 = vsub.f32 1.0, %v1685
    %v1687 = vmul.f32 %v1684, %v1686
    %v1688 = vadd.f32 %v1684, %v1687
    %vm1689 = vweird.f32 %v1172
    %vm1690 = vweird.f32 %v1684
    %vm1691 = vmor %vm1689, %vm1690
    %v1692 = vsel %vm1691, %v1684, %v1688
    %v1693 = vand.u32 2147483647, %v1172
    %vm1694 = vcmp.eq.f32.partialorder %v1693, 8.507059e+37
    %v1695 = vand.u32 %v1172, 2147483648
    %v1696 = vor.u32 1.1754944e-38, %v1695
    %v1697 = vsel %vm1694, %v1696, %v1692
    %v1698 = vmul.f32 1.0, %v1697
    %v1699 = vrcp.pop %v1173
    %v1700 = vmul.f32 %v1173, %v1699
    %v1701 = vsub.f32 1.0, %v1700
    %v1702 = vmul.f32 %v1699, %v1701
    %v1703 = vadd.f32 %v1699, %v1702
    %vm1704 = vweird.f32 %v1173
    %vm1705 = vweird.f32 %v1699
    %vm1706 = vmor %vm1704, %vm1705
    %v1707 = vsel %vm1706, %v1699, %v1703
    %v1708 = vand.u32 2147483647, %v1173
    %vm1709 = vcmp.eq.f32.partialorder %v1708, 8.507059e+37
    %v1710 = vand.u32 %v1173, 2147483648
    %v1711 = vor.u32 1.1754944e-38, %v1710
    %v1712 = vsel %vm1709, %v1711, %v1707
    %v1713 = vmul.f32 1.0, %v1712
    %v1714 = vrcp.pop %v1174
    %v1715 = vmul.f32 %v1174, %v1714
    %v1716 = vsub.f32 1.0, %v1715
    %v1717 = vmul.f32 %v1714, %v1716
    %v1718 = vadd.f32 %v1714, %v1717
    %vm1719 = vweird.f32 %v1174
    %vm1720 = vweird.f32 %v1714
    %vm1721 = vmor %vm1719, %vm1720
    %v1722 = vsel %vm1721, %v1714, %v1718
    %v1723 = vand.u32 2147483647, %v1174
    %vm1724 = vcmp.eq.f32.partialorder %v1723, 8.507059e+37
    %v1725 = vand.u32 %v1174, 2147483648
    %v1726 = vor.u32 1.1754944e-38, %v1725
    %v1727 = vsel %vm1724, %v1726, %v1722
    %v1728 = vmul.f32 1.0, %v1727
    %v1729 = vrcp.pop %v1175
    %v1730 = vmul.f32 %v1175, %v1729
    %v1731 = vsub.f32 1.0, %v1730
    %v1732 = vmul.f32 %v1729, %v1731
    %v1733 = vadd.f32 %v1729, %v1732
    %vm1734 = vweird.f32 %v1175
    %vm1735 = vweird.f32 %v1729
    %vm1736 = vmor %vm1734, %vm1735
    %v1737 = vsel %vm1736, %v1729, %v1733
    %v1738 = vand.u32 2147483647, %v1175
    %vm1739 = vcmp.eq.f32.partialorder %v1738, 8.507059e+37
    %v1740 = vand.u32 %v1175, 2147483648
    %v1741 = vor.u32 1.1754944e-38, %v1740
    %v1742 = vsel %vm1739, %v1741, %v1737
    %v1743 = vmul.f32 1.0, %v1742
    %v1744 = vrcp.pop %v1176
    %v1745 = vmul.f32 %v1176, %v1744
    %v1746 = vsub.f32 1.0, %v1745
    %v1747 = vmul.f32 %v1744, %v1746
    %v1748 = vadd.f32 %v1744, %v1747
    %vm1749 = vweird.f32 %v1176
    %vm1750 = vweird.f32 %v1744
    %vm1751 = vmor %vm1749, %vm1750
    %v1752 = vsel %vm1751, %v1744, %v1748
    %v1753 = vand.u32 2147483647, %v1176
    %vm1754 = vcmp.eq.f32.partialorder %v1753, 8.507059e+37
    %v1755 = vand.u32 %v1176, 2147483648
    %v1756 = vor.u32 1.1754944e-38, %v1755
    %v1757 = vsel %vm1754, %v1756, %v1752
    %v1758 = vmul.f32 1.0, %v1757
    %v1759 = vrcp.pop %v1177
    %v1760 = vmul.f32 %v1177, %v1759
    %v1761 = vsub.f32 1.0, %v1760
    %v1762 = vmul.f32 %v1759, %v1761
    %v1763 = vadd.f32 %v1759, %v1762
    %vm1764 = vweird.f32 %v1177
    %vm1765 = vweird.f32 %v1759
    %vm1766 = vmor %vm1764, %vm1765
    %v1767 = vsel %vm1766, %v1759, %v1763
    %v1768 = vand.u32 2147483647, %v1177
    %vm1769 = vcmp.eq.f32.partialorder %v1768, 8.507059e+37
    %v1770 = vand.u32 %v1177, 2147483648
    %v1771 = vor.u32 1.1754944e-38, %v1770
    %v1772 = vsel %vm1769, %v1771, %v1767
    %v1773 = vmul.f32 1.0, %v1772
    %v1774 = vrcp.pop %v1178
    %v1775 = vmul.f32 %v1178, %v1774
    %v1776 = vsub.f32 1.0, %v1775
    %v1777 = vmul.f32 %v1774, %v1776
    %v1778 = vadd.f32 %v1774, %v1777
    %vm1779 = vweird.f32 %v1178
    %vm1780 = vweird.f32 %v1774
    %vm1781 = vmor %vm1779, %vm1780
    %v1782 = vsel %vm1781, %v1774, %v1778
    %v1783 = vand.u32 2147483647, %v1178
    %vm1784 = vcmp.eq.f32.partialorder %v1783, 8.507059e+37
    %v1785 = vand.u32 %v1178, 2147483648
    %v1786 = vor.u32 1.1754944e-38, %v1785
    %v1787 = vsel %vm1784, %v1786, %v1782
    %v1788 = vmul.f32 1.0, %v1787
    %v1789 = vrcp.pop %v1179
    %v1790 = vmul.f32 %v1179, %v1789
    %v1791 = vsub.f32 1.0, %v1790
    %v1792 = vmul.f32 %v1789, %v1791
    %v1793 = vadd.f32 %v1789, %v1792
    %vm1794 = vweird.f32 %v1179
    %vm1795 = vweird.f32 %v1789
    %vm1796 = vmor %vm1794, %vm1795
    %v1797 = vsel %vm1796, %v1789, %v1793
    %v1798 = vand.u32 2147483647, %v1179
    %vm1799 = vcmp.eq.f32.partialorder %v1798, 8.507059e+37
    %v1800 = vand.u32 %v1179, 2147483648
    %v1801 = vor.u32 1.1754944e-38, %v1800
    %v1802 = vsel %vm1799, %v1801, %v1797
    %v1803 = vmul.f32 1.0, %v1802
    %v1804 = vrcp.pop %v1180
    %v1805 = vmul.f32 %v1180, %v1804
    %v1806 = vsub.f32 1.0, %v1805
    %v1807 = vmul.f32 %v1804, %v1806
    %v1808 = vadd.f32 %v1804, %v1807
    %vm1809 = vweird.f32 %v1180
    %vm1810 = vweird.f32 %v1804
    %vm1811 = vmor %vm1809, %vm1810
    %v1812 = vsel %vm1811, %v1804, %v1808
    %v1813 = vand.u32 2147483647, %v1180
    %vm1814 = vcmp.eq.f32.partialorder %v1813, 8.507059e+37
    %v1815 = vand.u32 %v1180, 2147483648
    %v1816 = vor.u32 1.1754944e-38, %v1815
    %v1817 = vsel %vm1814, %v1816, %v1812
    %v1818 = vmul.f32 1.0, %v1817
    %v1819 = vrcp.pop %v1181
    %v1820 = vmul.f32 %v1181, %v1819
    %v1821 = vsub.f32 1.0, %v1820
    %v1822 = vmul.f32 %v1819, %v1821
    %v1823 = vadd.f32 %v1819, %v1822
    %vm1824 = vweird.f32 %v1181
    %vm1825 = vweird.f32 %v1819
    %vm1826 = vmor %vm1824, %vm1825
    %v1827 = vsel %vm1826, %v1819, %v1823
    %v1828 = vand.u32 2147483647, %v1181
    %vm1829 = vcmp.eq.f32.partialorder %v1828, 8.507059e+37
    %v1830 = vand.u32 %v1181, 2147483648
    %v1831 = vor.u32 1.1754944e-38, %v1830
    %v1832 = vsel %vm1829, %v1831, %v1827
    %v1833 = vmul.f32 1.0, %v1832
    %v1834 = vrcp.pop %v1182
    %v1835 = vmul.f32 %v1182, %v1834
    %v1836 = vsub.f32 1.0, %v1835
    %v1837 = vmul.f32 %v1834, %v1836
    %v1838 = vadd.f32 %v1834, %v1837
    %vm1839 = vweird.f32 %v1182
    %vm1840 = vweird.f32 %v1834
    %vm1841 = vmor %vm1839, %vm1840
    %v1842 = vsel %vm1841, %v1834, %v1838
    %v1843 = vand.u32 2147483647, %v1182
    %vm1844 = vcmp.eq.f32.partialorder %v1843, 8.507059e+37
    %v1845 = vand.u32 %v1182, 2147483648
    %v1846 = vor.u32 1.1754944e-38, %v1845
    %v1847 = vsel %vm1844, %v1846, %v1842
    %v1848 = vmul.f32 1.0, %v1847
    %v1849 = vrcp.pop %v1183
    %v1850 = vmul.f32 %v1183, %v1849
    %v1851 = vsub.f32 1.0, %v1850
    %v1852 = vmul.f32 %v1849, %v1851
    %v1853 = vadd.f32 %v1849, %v1852
    %vm1854 = vweird.f32 %v1183
    %vm1855 = vweird.f32 %v1849
    %vm1856 = vmor %vm1854, %vm1855
    %v1857 = vsel %vm1856, %v1849, %v1853
    %v1858 = vand.u32 2147483647, %v1183
    %vm1859 = vcmp.eq.f32.partialorder %v1858, 8.507059e+37
    %v1860 = vand.u32 %v1183, 2147483648
    %v1861 = vor.u32 1.1754944e-38, %v1860
    %v1862 = vsel %vm1859, %v1861, %v1857
    %v1863 = vmul.f32 1.0, %v1862
    %v1864 = vrcp.pop %v1184
    %v1865 = vmul.f32 %v1184, %v1864
    %v1866 = vsub.f32 1.0, %v1865
    %v1867 = vmul.f32 %v1864, %v1866
    %v1868 = vadd.f32 %v1864, %v1867
    %vm1869 = vweird.f32 %v1184
    %vm1870 = vweird.f32 %v1864
    %vm1871 = vmor %vm1869, %vm1870
    %v1872 = vsel %vm1871, %v1864, %v1868
    %v1873 = vand.u32 2147483647, %v1184
    %vm1874 = vcmp.eq.f32.partialorder %v1873, 8.507059e+37
    %v1875 = vand.u32 %v1184, 2147483648
    %v1876 = vor.u32 1.1754944e-38, %v1875
    %v1877 = vsel %vm1874, %v1876, %v1872
    %v1878 = vmul.f32 1.0, %v1877
    %v1879 = vrcp.pop %v1185
    %v1880 = vmul.f32 %v1185, %v1879
    %v1881 = vsub.f32 1.0, %v1880
    %v1882 = vmul.f32 %v1879, %v1881
    %v1883 = vadd.f32 %v1879, %v1882
    %vm1884 = vweird.f32 %v1185
    %vm1885 = vweird.f32 %v1879
    %vm1886 = vmor %vm1884, %vm1885
    %v1887 = vsel %vm1886, %v1879, %v1883
    %v1888 = vand.u32 2147483647, %v1185
    %vm1889 = vcmp.eq.f32.partialorder %v1888, 8.507059e+37
    %v1890 = vand.u32 %v1185, 2147483648
    %v1891 = vor.u32 1.1754944e-38, %v1890
    %v1892 = vsel %vm1889, %v1891, %v1887
    %v1893 = vmul.f32 1.0, %v1892
    %v1894 = vrcp.pop %v1186
    %v1895 = vmul.f32 %v1186, %v1894
    %v1896 = vsub.f32 1.0, %v1895
    %v1897 = vmul.f32 %v1894, %v1896
    %v1898 = vadd.f32 %v1894, %v1897
    %vm1899 = vweird.f32 %v1186
    %vm1900 = vweird.f32 %v1894
    %vm1901 = vmor %vm1899, %vm1900
    %v1902 = vsel %vm1901, %v1894, %v1898
    %v1903 = vand.u32 2147483647, %v1186
    %vm1904 = vcmp.eq.f32.partialorder %v1903, 8.507059e+37
    %v1905 = vand.u32 %v1186, 2147483648
    %v1906 = vor.u32 1.1754944e-38, %v1905
    %v1907 = vsel %vm1904, %v1906, %v1902
    %v1908 = vmul.f32 1.0, %v1907
    %v1909 = vrcp.pop %v1187
    %v1910 = vmul.f32 %v1187, %v1909
    %v1911 = vsub.f32 1.0, %v1910
    %v1912 = vmul.f32 %v1909, %v1911
    %v1913 = vadd.f32 %v1909, %v1912
    %vm1914 = vweird.f32 %v1187
    %vm1915 = vweird.f32 %v1909
    %vm1916 = vmor %vm1914, %vm1915
    %v1917 = vsel %vm1916, %v1909, %v1913
    %v1918 = vand.u32 2147483647, %v1187
    %vm1919 = vcmp.eq.f32.partialorder %v1918, 8.507059e+37
    %v1920 = vand.u32 %v1187, 2147483648
    %v1921 = vor.u32 1.1754944e-38, %v1920
    %v1922 = vsel %vm1919, %v1921, %v1917
    %v1923 = vmul.f32 1.0, %v1922
    %v1924 = vrcp.pop %v1188
    %v1925 = vmul.f32 %v1188, %v1924
    %v1926 = vsub.f32 1.0, %v1925
    %v1927 = vmul.f32 %v1924, %v1926
    %v1928 = vadd.f32 %v1924, %v1927
    %vm1929 = vweird.f32 %v1188
    %vm1930 = vweird.f32 %v1924
    %vm1931 = vmor %vm1929, %vm1930
    %v1932 = vsel %vm1931, %v1924, %v1928
    %v1933 = vand.u32 2147483647, %v1188
    %vm1934 = vcmp.eq.f32.partialorder %v1933, 8.507059e+37
    %v1935 = vand.u32 %v1188, 2147483648
    %v1936 = vor.u32 1.1754944e-38, %v1935
    %v1937 = vsel %vm1934, %v1936, %v1932
    %v1938 = vmul.f32 1.0, %v1937
    %v1939 = vsub.f32 %v939, %v15
    %v1940 = vsub.f32 %v940, %v16
    %v1941 = vsub.f32 %v941, %v17
    %v1942 = vsub.f32 %v942, %v18
    %v1943 = vsub.f32 %v943, %v19
    %v1944 = vsub.f32 %v944, %v20
    %v1945 = vsub.f32 %v945, %v21
    %v1946 = vsub.f32 %v946, %v22
    %v1947 = vsub.f32 %v947, %v23
    %v1948 = vsub.f32 %v948, %v24
    %v1949 = vsub.f32 %v949, %v25
    %v1950 = vsub.f32 %v950, %v26
    %v1951 = vsub.f32 %v951, %v27
    %v1952 = vsub.f32 %v952, %v28
    %v1953 = vsub.f32 %v953, %v29
    %v1954 = vsub.f32 %v954, %v30
    %v1955 = vsub.f32 %v955, %v31
    %v1956 = vsub.f32 %v956, %v32
    %v1957 = vsub.f32 %v957, %v33
    %v1958 = vsub.f32 %v958, %v34
    %v1959 = vsub.f32 %v959, %v35
    %v1960 = vsub.f32 %v960, %v36
    %v1961 = vsub.f32 %v961, %v37
    %v1962 = vsub.f32 %v962, %v38
    %v1963 = vsub.f32 %v963, %v39
    %v1964 = vsub.f32 %v964, %v40
    %v1965 = vsub.f32 %v965, %v41
    %v1966 = vsub.f32 %v966, %v42
    %v1967 = vsub.f32 %v967, %v43
    %v1968 = vsub.f32 %v968, %v44
    %v1969 = vsub.f32 %v969, %v45
    %v1970 = vsub.f32 %v970, %v46
    %v1971 = vsub.f32 %v971, %v47
    %v1972 = vsub.f32 %v972, %v48
    %v1973 = vsub.f32 %v973, %v49
    %v1974 = vsub.f32 %v974, %v50
    %v1975 = vsub.f32 %v975, %v51
    %v1976 = vsub.f32 %v976, %v52
    %v1977 = vsub.f32 %v977, %v53
    %v1978 = vsub.f32 %v978, %v54
    %v1979 = vsub.f32 %v979, %v55
    %v1980 = vsub.f32 %v980, %v56
    %v1981 = vsub.f32 %v981, %v57
    %v1982 = vsub.f32 %v982, %v58
    %v1983 = vsub.f32 %v983, %v59
    %v1984 = vsub.f32 %v984, %v60
    %v1985 = vsub.f32 %v985, %v61
    %v1986 = vsub.f32 %v986, %v62
    %v1987 = vsub.f32 %v987, %v63
    %v1988 = vsub.f32 %v988, %v64
    %v1989 = vmul.f32 %v1203, %v1939
    %v1990 = vmul.f32 %v1218, %v1940
    %v1991 = vmul.f32 %v1233, %v1941
    %v1992 = vmul.f32 %v1248, %v1942
    %v1993 = vmul.f32 %v1263, %v1943
    %v1994 = vmul.f32 %v1278, %v1944
    %v1995 = vmul.f32 %v1293, %v1945
    %v1996 = vmul.f32 %v1308, %v1946
    %v1997 = vmul.f32 %v1323, %v1947
    %v1998 = vmul.f32 %v1338, %v1948
    %v1999 = vmul.f32 %v1353, %v1949
    %v2000 = vmul.f32 %v1368, %v1950
    %v2001 = vmul.f32 %v1383, %v1951
    %v2002 = vmul.f32 %v1398, %v1952
    %v2003 = vmul.f32 %v1413, %v1953
    %v2004 = vmul.f32 %v1428, %v1954
    %v2005 = vmul.f32 %v1443, %v1955
    %v2006 = vmul.f32 %v1458, %v1956
    %v2007 = vmul.f32 %v1473, %v1957
    %v2008 = vmul.f32 %v1488, %v1958
    %v2009 = vmul.f32 %v1503, %v1959
    %v2010 = vmul.f32 %v1518, %v1960
    %v2011 = vmul.f32 %v1533, %v1961
    %v2012 = vmul.f32 %v1548, %v1962
    %v2013 = vmul.f32 %v1563, %v1963
    %v2014 = vmul.f32 %v1578, %v1964
    %v2015 = vmul.f32 %v1593, %v1965
    %v2016 = vmul.f32 %v1608, %v1966
    %v2017 = vmul.f32 %v1623, %v1967
    %v2018 = vmul.f32 %v1638, %v1968
    %v2019 = vmul.f32 %v1653, %v1969
    %v2020 = vmul.f32 %v1668, %v1970
    %v2021 = vmul.f32 %v1683, %v1971
    %v2022 = vmul.f32 %v1698, %v1972
    %v2023 = vmul.f32 %v1713, %v1973
    %v2024 = vmul.f32 %v1728, %v1974
    %v2025 = vmul.f32 %v1743, %v1975
    %v2026 = vmul.f32 %v1758, %v1976
    %v2027 = vmul.f32 %v1773, %v1977
    %v2028 = vmul.f32 %v1788, %v1978
    %v2029 = vmul.f32 %v1803, %v1979
    %v2030 = vmul.f32 %v1818, %v1980
    %v2031 = vmul.f32 %v1833, %v1981
    %v2032 = vmul.f32 %v1848, %v1982
    %v2033 = vmul.f32 %v1863, %v1983
    %v2034 = vmul.f32 %v1878, %v1984
    %v2035 = vmul.f32 %v1893, %v1985
    %v2036 = vmul.f32 %v1908, %v1986
    %v2037 = vmul.f32 %v1923, %v1987
    %v2038 = vmul.f32 %v1938, %v1988
    %v2039 = vadd.f32 %v1989, %v15
    %v2040 = vadd.f32 %v1990, %v16
    %v2041 = vadd.f32 %v1991, %v17
    %v2042 = vadd.f32 %v1992, %v18
    %v2043 = vadd.f32 %v1993, %v19
    %v2044 = vadd.f32 %v1994, %v20
    %v2045 = vadd.f32 %v1995, %v21
    %v2046 = vadd.f32 %v1996, %v22
    %v2047 = vadd.f32 %v1997, %v23
    %v2048 = vadd.f32 %v1998, %v24
    %v2049 = vadd.f32 %v1999, %v25
    %v2050 = vadd.f32 %v2000, %v26
    %v2051 = vadd.f32 %v2001, %v27
    %v2052 = vadd.f32 %v2002, %v28
    %v2053 = vadd.f32 %v2003, %v29
    %v2054 = vadd.f32 %v2004, %v30
    %v2055 = vadd.f32 %v2005, %v31
    %v2056 = vadd.f32 %v2006, %v32
    %v2057 = vadd.f32 %v2007, %v33
    %v2058 = vadd.f32 %v2008, %v34
    %v2059 = vadd.f32 %v2009, %v35
    %v2060 = vadd.f32 %v2010, %v36
    %v2061 = vadd.f32 %v2011, %v37
    %v2062 = vadd.f32 %v2012, %v38
    %v2063 = vadd.f32 %v2013, %v39
    %v2064 = vadd.f32 %v2014, %v40
    %v2065 = vadd.f32 %v2015, %v41
    %v2066 = vadd.f32 %v2016, %v42
    %v2067 = vadd.f32 %v2017, %v43
    %v2068 = vadd.f32 %v2018, %v44
    %v2069 = vadd.f32 %v2019, %v45
    %v2070 = vadd.f32 %v2020, %v46
    %v2071 = vadd.f32 %v2021, %v47
    %v2072 = vadd.f32 %v2022, %v48
    %v2073 = vadd.f32 %v2023, %v49
    %v2074 = vadd.f32 %v2024, %v50
    %v2075 = vadd.f32 %v2025, %v51
    %v2076 = vadd.f32 %v2026, %v52
    %v2077 = vadd.f32 %v2027, %v53
    %v2078 = vadd.f32 %v2028, %v54
    %v2079 = vadd.f32 %v2029, %v55
    %v2080 = vadd.f32 %v2030, %v56
    %v2081 = vadd.f32 %v2031, %v57
    %v2082 = vadd.f32 %v2032, %v58
    %v2083 = vadd.f32 %v2033, %v59
    %v2084 = vadd.f32 %v2034, %v60
    %v2085 = vadd.f32 %v2035, %v61
    %v2086 = vadd.f32 %v2036, %v62
    %v2087 = vadd.f32 %v2037, %v63
    %v2088 = vadd.f32 %v2038, %v64
    %2089 = vst [vmem:[#allocation2] sm:$0xff] %v2039
    %2090 = vst [vmem:[#allocation2 + $0x8] sm:$0xff] %v2040
    %2091 = vst [vmem:[#allocation2 + $0x10] sm:$0xff] %v2041
    %2092 = vst [vmem:[#allocation2 + $0x18] sm:$0xff] %v2042
    %2093 = vst [vmem:[#allocation2 + $0x20] sm:$0xff] %v2043
    %2094 = vst [vmem:[#allocation2 + $0x28] sm:$0xff] %v2044
    %2095 = vst [vmem:[#allocation2 + $0x30] sm:$0xff] %v2045
    %2096 = vst [vmem:[#allocation2 + $0x38] sm:$0xff] %v2046
    %2097 = vst [vmem:[#allocation2 + $0x40] sm:$0xff] %v2047
    %2098 = vst [vmem:[#allocation2 + $0x48] sm:$0xff] %v2048
    %2099 = vst [vmem:[#allocation2 + $0x50] sm:$0xff] %v2049
    %2100 = vst [vmem:[#allocation2 + $0x58] sm:$0xff] %v2050
    %2101 = vst [vmem:[#allocation2 + $0x60] sm:$0xff] %v2051
    %2102 = vst [vmem:[#allocation2 + $0x68] sm:$0xff] %v2052
    %2103 = vst [vmem:[#allocation2 + $0x70] sm:$0xff] %v2053
    %2104 = vst [vmem:[#allocation2 + $0x78] sm:$0xff] %v2054
    %2105 = vst [vmem:[#allocation2 + $0x80] sm:$0xff] %v2055
    %2106 = vst [vmem:[#allocation2 + $0x88] sm:$0xff] %v2056
    %2107 = vst [vmem:[#allocation2 + $0x90] sm:$0xff] %v2057
    %2108 = vst [vmem:[#allocation2 + $0x98] sm:$0xff] %v2058
    %2109 = vst [vmem:[#allocation2 + $0xa0] sm:$0xff] %v2059
    %2110 = vst [vmem:[#allocation2 + $0xa8] sm:$0xff] %v2060
    %2111 = vst [vmem:[#allocation2 + $0xb0] sm:$0xff] %v2061
    %2112 = vst [vmem:[#allocation2 + $0xb8] sm:$0xff] %v2062
    %2113 = vst [vmem:[#allocation2 + $0xc0] sm:$0xff] %v2063
    %2114 = vst [vmem:[#allocation2 + $0xc8] sm:$0xff] %v2064
    %2115 = vst [vmem:[#allocation2 + $0xd0] sm:$0xff] %v2065
    %2116 = vst [vmem:[#allocation2 + $0xd8] sm:$0xff] %v2066
    %2117 = vst [vmem:[#allocation2 + $0xe0] sm:$0xff] %v2067
    %2118 = vst [vmem:[#allocation2 + $0xe8] sm:$0xff] %v2068
    %2119 = vst [vmem:[#allocation2 + $0xf0] sm:$0xff] %v2069
    %2120 = vst [vmem:[#allocation2 + $0xf8] sm:$0xff] %v2070
    %2121 = vst [vmem:[#allocation2 + $0x100] sm:$0xff] %v2071
    %2122 = vst [vmem:[#allocation2 + $0x108] sm:$0xff] %v2072
    %2123 = vst [vmem:[#allocation2 + $0x110] sm:$0xff] %v2073
    %2124 = vst [vmem:[#allocation2 + $0x118] sm:$0xff] %v2074
    %2125 = vst [vmem:[#allocation2 + $0x120] sm:$0xff] %v2075
    %2126 = vst [vmem:[#allocation2 + $0x128] sm:$0xff] %v2076
    %2127 = vst [vmem:[#allocation2 + $0x130] sm:$0xff] %v2077
    %2128 = vst [vmem:[#allocation2 + $0x138] sm:$0xff] %v2078
    %2129 = vst [vmem:[#allocation2 + $0x140] sm:$0xff] %v2079
    %2130 = vst [vmem:[#allocation2 + $0x148] sm:$0xff] %v2080
    %2131 = vst [vmem:[#allocation2 + $0x150] sm:$0xff] %v2081
    %2132 = vst [vmem:[#allocation2 + $0x158] sm:$0xff] %v2082
    %2133 = vst [vmem:[#allocation2 + $0x160] sm:$0xff] %v2083
    %2134 = vst [vmem:[#allocation2 + $0x168] sm:$0xff] %v2084
    %2135 = vst [vmem:[#allocation2 + $0x170] sm:$0xff] %v2085
    %2136 = vst [vmem:[#allocation2 + $0x178] sm:$0xff] %v2086
    %2137 = vst [vmem:[#allocation2 + $0x180] sm:$0xff] %v2087
    %2138 = vst [vmem:[#allocation2 + $0x188] sm:$0xff] %v2088
    // Predicated region
    $region14: #{highway_forward.1} parent=1 // pred_check
      _
    $region15: #{highway_forward.1} parent=1 // pred_check_branch
      %2140 = sbr.rel (0) target = $region17
    $region16: #{highway_forward.1} parent=1 // pred_region
      %2142 = vsyncadd [#allocation3], 0
      %s2143 = sshll.u32 [#allocation2], 4
      %s2144 = int_to_ptr.vmem [resolvable:$true] %s2143
      %s2145 = sshll.u32 %s3, 4
      %s2146 = int_to_ptr.hbm [resolvable:$true] %s2145
      %2151 = dma.vmem_to_hbm [thread:$0]  %s2144, 6400, %s2146, [#allocation3], 256, 256, 16
    $region17: #{highway_forward.1} parent=1 // pred_fallthru
      _
    // Predicated region
    $region18: #{highway_forward.1} parent=1 // pred_check
      _
    $region19: #{highway_forward.1} parent=1 // pred_check_branch
      %2153 = sbr.rel (0) target = $region21
    $region20: #{highway_forward.1} parent=1 // pred_region
      %2155 = dma.done [#allocation3], 6400
    $region21: #{highway_forward.1} parent=1 // pred_fallthru
      _
    %2156 = vsyncpa [#allocation3], 1

</llo_original>
